<compile_context>
chip_gen: v7x
topology: tpu7x:2x2x1
jax: 0.10.0
libtpu: 0.0.40
codegen_flags: <defaults>
</compile_context>

<pallas_src>
import jax
import jax.numpy as jnp
from jax.experimental import pallas as pl
from jax.experimental.pallas import tpu as pltpu


def _graphsage_kernel(self_ref, adj_ref, feat_ref, wself_ref, wneigh_ref,
                      wcls_ref, out_ref, acc_ref):
    k = pl.program_id(1)

    @pl.when(k == 0)
    def _init():
        acc_ref[...] = jnp.zeros_like(acc_ref)

    # Neighbor mean-aggregation partial sum: (bm, bk) @ (bk, feat) -> (bm, feat)
    acc_ref[...] += jnp.dot(adj_ref[...], feat_ref[...],
                            preferred_element_type=jnp.float32)

    @pl.when(k == pl.num_programs(1) - 1)
    def _finalize():
        # Encoder linear (+ ReLU): self @ W_self + neigh @ W_neigh  (concat-free)
        h = jnp.dot(self_ref[...], wself_ref[...],
                    preferred_element_type=jnp.float32)
        h += jnp.dot(acc_ref[...].astype(wneigh_ref.dtype), wneigh_ref[...],
                     preferred_element_type=jnp.float32)
        embeds_t = jnp.maximum(h, 0.0)                        # == embeds.T tile
        # Classifier: (bm, embed) @ (embed, 128-padded classes) == (weight@embeds).T
        out_ref[...] = jnp.dot(embeds_t.astype(wcls_ref.dtype), wcls_ref[...],
                               preferred_element_type=jnp.float32)


def _pad_axis(x, axis, multiple):
    pad = (-x.shape[axis]) % multiple
    if pad == 0:
        return x
    widths = [(0, 0)] * x.ndim
    widths[axis] = (0, pad)
    return jnp.pad(x, widths)


def supervised_graphsage_forward(self_feats, adj_norm, features, w_enc, w_cls,
                                 *, bm=128, bk=256,
                                 vmem_limit_bytes=32 * 1024 * 1024):
    """Returns scores.t() == (batch, num_classes), matching the PyTorch module."""
    batch, feat = self_feats.shape
    n_total = features.shape[0]
    embed_dim = w_enc.shape[0]
    num_classes = w_cls.shape[0]
    assert w_enc.shape[1] == 2 * feat
    assert w_cls.shape[1] == embed_dim

    cast = lambda x: x.astype(jnp.bfloat16)

    # Zero-pad every matmul dim to lane/sublane-friendly sizes.  Padding rows /
    # columns are zeros, so they contribute nothing to any dot product.
    feat_p = max(128, ((feat + 127) // 128) * 128)
    embed_p = max(128, ((embed_dim + 127) // 128) * 128)
    cls_p = max(128, ((num_classes + 127) // 128) * 128)

    self_b = cast(_pad_axis(_pad_axis(self_feats, 0, bm), 1, feat_p))
    adj_b = cast(_pad_axis(_pad_axis(adj_norm, 0, bm), 1, bk))
    feat_b = cast(_pad_axis(_pad_axis(features, 0, bk), 1, feat_p))

    # Concat-free split of the encoder weight: W_enc = [W_self | W_neigh].
    w_self = jnp.zeros((feat_p, embed_p), jnp.float32)
    w_self = w_self.at[:feat, :embed_dim].set(jnp.transpose(w_enc[:, :feat]))
    w_neigh = jnp.zeros((feat_p, embed_p), jnp.float32)
    w_neigh = w_neigh.at[:feat, :embed_dim].set(jnp.transpose(w_enc[:, feat:]))
    w_self_b, w_neigh_b = cast(w_self), cast(w_neigh)

    # Lane-dense classifier: zero-pad num_classes up to a multiple of 128 lanes.
    w_cls_t = jnp.zeros((embed_p, cls_p), jnp.float32)
    w_cls_t = w_cls_t.at[:embed_dim, :num_classes].set(jnp.transpose(w_cls))
    w_cls_b = cast(w_cls_t)

    pb = self_b.shape[0]
    pn = feat_b.shape[0]
    grid = (pb // bm, pn // bk)

    out = pl.pallas_call(
        _graphsage_kernel,
        out_shape=jax.ShapeDtypeStruct((pb, cls_p), jnp.float32),
        grid_spec=pltpu.PrefetchScalarGridSpec(
            num_scalar_prefetch=0,
            grid=grid,
            in_specs=[
                pl.BlockSpec((bm, feat_p), lambda i, k: (i, 0)),     # self feats (resident per i)
                pl.BlockSpec((bm, bk), lambda i, k: (i, k)),         # adjacency tile (streamed)
                pl.BlockSpec((bk, feat_p), lambda i, k: (k, 0)),     # feature table tile (streamed)
                pl.BlockSpec((feat_p, embed_p), lambda i, k: (0, 0)),  # W_self (resident)
                pl.BlockSpec((feat_p, embed_p), lambda i, k: (0, 0)),  # W_neigh (resident)
                pl.BlockSpec((embed_p, cls_p), lambda i, k: (0, 0)),   # classifier (resident)
            ],
            out_specs=pl.BlockSpec((bm, cls_p), lambda i, k: (i, 0)),
            scratch_shapes=[pltpu.VMEM((bm, feat_p), jnp.float32)],   # neigh accumulator
        ),
        compiler_params=pltpu.CompilerParams(
            dimension_semantics=("parallel", "arbitrary"),
            vmem_limit_bytes=vmem_limit_bytes),
    )(self_b, adj_b, feat_b, w_self_b, w_neigh_b, w_cls_b)

    return out[:batch, :num_classes]


def xavier_uniform(key, shape):
    fan_out, fan_in = shape  # torch linear-style (out, in)
    bound = jnp.sqrt(6.0 / (fan_in + fan_out))
    return jax.random.uniform(key, shape, jnp.float32, -bound, bound)


if __name__ == "__main__":
    # Deterministic problem; sizes are tile-friendly so the MXU / vregs are not
    # mostly padding, while staying small (feature table is only 512 x 128).
    NUM_NODES = 512     # total nodes in the graph
    FEAT_DIM = 128      # raw feature dim
    EMBED_DIM = 128     # enc.embed_dim
    NUM_CLASSES = 8
    BATCH = 128         # len(nodes)

    key = jax.random.PRNGKey(0)
    k_feat, k_adj, k_wenc, k_wcls, k_nodes = jax.random.split(key, 5)

    # Graph data.
    features = jax.random.normal(k_feat, (NUM_NODES, FEAT_DIM), jnp.float32)
    adj = (jax.random.uniform(k_adj, (NUM_NODES, NUM_NODES)) < 0.15)
    adj = adj.at[jnp.arange(NUM_NODES),
                 (jnp.arange(NUM_NODES) + 1) % NUM_NODES].set(True)
    adj = adj.astype(jnp.float32)
    adj_norm_full = adj / jnp.sum(adj, axis=1, keepdims=True)

    # Parameters (xavier_uniform, as in the module / encoder __init__).
    w_enc = xavier_uniform(k_wenc, (EMBED_DIM, 2 * FEAT_DIM))   # encoder weight
    w_cls = xavier_uniform(k_wcls, (NUM_CLASSES, EMBED_DIM))    # self.weight

    # Batch of node indices; gather their rows in plain JAX (data-dependent gather).
    nodes = jax.random.randint(k_nodes, (BATCH,), 0, NUM_NODES)
    self_feats = features[nodes]            # (batch, feat)
    adj_norm = adj_norm_full[nodes]         # (batch, N) mean-aggregation rows

    scores = supervised_graphsage_forward(self_feats, adj_norm, features,
                                          w_enc, w_cls)
    scores = jax.block_until_ready(scores)

    # Pure-JAX reference with the same bf16 operand precision / f32 accumulation.
    bf = lambda x: x.astype(jnp.bfloat16)
    w_self_r = bf(jnp.transpose(w_enc[:, :FEAT_DIM]))
    w_neigh_r = bf(jnp.transpose(w_enc[:, FEAT_DIM:]))
    w_cls_r = bf(jnp.transpose(w_cls))
    neigh_ref = jnp.dot(bf(adj_norm), bf(features),
                        preferred_element_type=jnp.float32)
    h_ref = jnp.dot(bf(self_feats), w_self_r,
                    preferred_element_type=jnp.float32)
    h_ref += jnp.dot(bf(neigh_ref), w_neigh_r,
                     preferred_element_type=jnp.float32)
    embeds_ref = jnp.maximum(h_ref, 0.0)
    scores_ref = jnp.dot(bf(embeds_ref), w_cls_r,
                         preferred_element_type=jnp.float32)

    assert scores.shape == (BATCH, NUM_CLASSES)
    assert jnp.allclose(scores, scores_ref, atol=3e-2, rtol=3e-2)

    print("KERNEL_OK")
</pallas_src>

<mosaic_0001>
module attributes {stable_mosaic.version = 11 : i64} {
  func.func @_graphsage_kernel(%arg0: i32, %arg1: i32, %arg2: memref<128x128xbf16, #tpu.memory_space<vmem>>, %arg3: memref<128x256xbf16, #tpu.memory_space<vmem>>, %arg4: memref<256x128xbf16, #tpu.memory_space<vmem>>, %arg5: memref<128x128xbf16, #tpu.memory_space<vmem>>, %arg6: memref<128x128xbf16, #tpu.memory_space<vmem>>, %arg7: memref<128x128xbf16, #tpu.memory_space<vmem>>, %arg8: memref<128x128xf32, #tpu.memory_space<vmem>>, %arg9: memref<128x128xf32, #tpu.memory_space<vmem>>) attributes {dimension_semantics = [#tpu.dimension_semantics<parallel>, #tpu.dimension_semantics<arbitrary>], iteration_bounds = array<i64: 1, 2>, scalar_prefetch = 0 : i64, scratch_operands = 1 : i64, tpu.core_type = #tpu.core_type<tc>, window_params = [{transform_indices = @transform_0, window_bounds = array<i64: 128, 128>}, {transform_indices = @transform_1, window_bounds = array<i64: 128, 256>}, {transform_indices = @transform_2, window_bounds = array<i64: 256, 128>}, {pipeline_mode = #tpu.pipeline_mode<synchronous>, transform_indices = @transform_3, window_bounds = array<i64: 128, 128>}, {pipeline_mode = #tpu.pipeline_mode<synchronous>, transform_indices = @transform_4, window_bounds = array<i64: 128, 128>}, {pipeline_mode = #tpu.pipeline_mode<synchronous>, transform_indices = @transform_5, window_bounds = array<i64: 128, 128>}, {transform_indices = @transform_6, window_bounds = array<i64: 128, 128>}]} {
    %c0_i32 = arith.constant 0 : i32
    %0 = arith.cmpi eq, %arg1, %c0_i32 : i32
    %1 = arith.extui %0 : i1 to i32
    %c0_i32_0 = arith.constant 0 : i32
    %2 = arith.cmpi ne, %1, %c0_i32_0 : i32
    scf.if %2 {
      %cst_9 = arith.constant 0.000000e+00 : f32
      %12 = vector.broadcast %cst_9 : f32 to vector<128x128xf32>
      %c0_10 = arith.constant 0 : index
      %c0_11 = arith.constant 0 : index
      %13 = vector.load %arg9[%c0_10, %c0_11] : memref<128x128xf32, #tpu.memory_space<vmem>>, vector<128x128xf32>
      tpu.vector_store %arg9[%c0_10, %c0_11], %12 {strides = array<i32>} : memref<128x128xf32, #tpu.memory_space<vmem>>, vector<128x128xf32>,
    } else {
    }
    %c0 = arith.constant 0 : index
    %c0_1 = arith.constant 0 : index
    %3 = vector.load %arg9[%c0, %c0_1] : memref<128x128xf32, #tpu.memory_space<vmem>>, vector<128x128xf32>
    %c0_2 = arith.constant 0 : index
    %c0_3 = arith.constant 0 : index
    %4 = vector.load %arg3[%c0_2, %c0_3] : memref<128x256xbf16, #tpu.memory_space<vmem>>, vector<128x256xbf16>
    %c0_4 = arith.constant 0 : index
    %c0_5 = arith.constant 0 : index
    %5 = vector.load %arg4[%c0_4, %c0_5] : memref<256x128xbf16, #tpu.memory_space<vmem>>, vector<256x128xbf16>
    %cst = arith.constant dense<0.000000e+00> : vector<128x128xf32>
    %6 = tpu.matmul %4, %5, %cst {dimension_numbers = #tpu.dot_dimension_numbers<[1], [0], [0], [1], [0, 0, 1, 1], [], []>} : vector<128x256xbf16>, vector<256x128xbf16>, vector<128x128xf32> -> vector<128x128xf32>
    %7 = arith.addf %3, %6 : vector<128x128xf32>
    %c0_6 = arith.constant 0 : index
    %c0_7 = arith.constant 0 : index
    %8 = vector.load %arg9[%c0_6, %c0_7] : memref<128x128xf32, #tpu.memory_space<vmem>>, vector<128x128xf32>
    tpu.vector_store %arg9[%c0_6, %c0_7], %7 {strides = array<i32>} : memref<128x128xf32, #tpu.memory_space<vmem>>, vector<128x128xf32>,
    %c1_i32 = arith.constant 1 : i32
    %9 = arith.cmpi eq, %arg1, %c1_i32 : i32
    %10 = arith.extui %9 : i1 to i32
    %c0_i32_8 = arith.constant 0 : i32
    %11 = arith.cmpi ne, %10, %c0_i32_8 : i32
    scf.if %11 {
      %c0_9 = arith.constant 0 : index
      %c0_10 = arith.constant 0 : index
      %12 = vector.load %arg2[%c0_9, %c0_10] : memref<128x128xbf16, #tpu.memory_space<vmem>>, vector<128x128xbf16>
      %c0_11 = arith.constant 0 : index
      %c0_12 = arith.constant 0 : index
      %13 = vector.load %arg5[%c0_11, %c0_12] : memref<128x128xbf16, #tpu.memory_space<vmem>>, vector<128x128xbf16>
      %cst_13 = arith.constant dense<0.000000e+00> : vector<128x128xf32>
      %14 = tpu.matmul %12, %13, %cst_13 {dimension_numbers = #tpu.dot_dimension_numbers<[1], [0], [0], [1], [0, 0, 1, 1], [], []>} : vector<128x128xbf16>, vector<128x128xbf16>, vector<128x128xf32> -> vector<128x128xf32>
      %c0_14 = arith.constant 0 : index
      %c0_15 = arith.constant 0 : index
      %15 = vector.load %arg9[%c0_14, %c0_15] : memref<128x128xf32, #tpu.memory_space<vmem>>, vector<128x128xf32>
      %16 = arith.truncf %15 : vector<128x128xf32> to vector<128x128xbf16>
      %c0_16 = arith.constant 0 : index
      %c0_17 = arith.constant 0 : index
      %17 = vector.load %arg6[%c0_16, %c0_17] : memref<128x128xbf16, #tpu.memory_space<vmem>>, vector<128x128xbf16>
      %cst_18 = arith.constant dense<0.000000e+00> : vector<128x128xf32>
      %18 = tpu.matmul %16, %17, %cst_18 {dimension_numbers = #tpu.dot_dimension_numbers<[1], [0], [0], [1], [0, 0, 1, 1], [], []>} : vector<128x128xbf16>, vector<128x128xbf16>, vector<128x128xf32> -> vector<128x128xf32>
      %19 = arith.addf %14, %18 : vector<128x128xf32>
      %cst_19 = arith.constant 0.000000e+00 : f32
      %20 = vector.broadcast %cst_19 : f32 to vector<128x128xf32>
      %21 = arith.maximumf %19, %20 : vector<128x128xf32>
      %22 = arith.truncf %21 : vector<128x128xf32> to vector<128x128xbf16>
      %c0_20 = arith.constant 0 : index
      %c0_21 = arith.constant 0 : index
      %23 = vector.load %arg7[%c0_20, %c0_21] : memref<128x128xbf16, #tpu.memory_space<vmem>>, vector<128x128xbf16>
      %cst_22 = arith.constant dense<0.000000e+00> : vector<128x128xf32>
      %24 = tpu.matmul %22, %23, %cst_22 {dimension_numbers = #tpu.dot_dimension_numbers<[1], [0], [0], [1], [0, 0, 1, 1], [], []>} : vector<128x128xbf16>, vector<128x128xbf16>, vector<128x128xf32> -> vector<128x128xf32>
      %c0_23 = arith.constant 0 : index
      %c0_24 = arith.constant 0 : index
      %25 = vector.load %arg8[%c0_23, %c0_24] : memref<128x128xf32, #tpu.memory_space<vmem>>, vector<128x128xf32>
      tpu.vector_store %arg8[%c0_23, %c0_24], %24 {strides = array<i32>} : memref<128x128xf32, #tpu.memory_space<vmem>>, vector<128x128xf32>,
    } else {
    }
    return
  }
  func.func @transform_0(%arg0: i32, %arg1: i32) -> (i32, i32) {
    %c0_i32 = arith.constant 0 : i32
    %c0_i32_0 = arith.constant 0 : i32
    return %arg0, %c0_i32 : i32, i32
  }
  func.func @transform_1(%arg0: i32, %arg1: i32) -> (i32, i32) {
    %c0_i32 = arith.constant 0 : i32
    return %arg0, %arg1 : i32, i32
  }
  func.func @transform_2(%arg0: i32, %arg1: i32) -> (i32, i32) {
    %c0_i32 = arith.constant 0 : i32
    %c0_i32_0 = arith.constant 0 : i32
    return %arg1, %c0_i32 : i32, i32
  }
  func.func @transform_3(%arg0: i32, %arg1: i32) -> (i32, i32) {
    %c0_i32 = arith.constant 0 : i32
    %c0_i32_0 = arith.constant 0 : i32
    %c0_i32_1 = arith.constant 0 : i32
    return %c0_i32, %c0_i32_0 : i32, i32
  }
  func.func @transform_4(%arg0: i32, %arg1: i32) -> (i32, i32) {
    %c0_i32 = arith.constant 0 : i32
    %c0_i32_0 = arith.constant 0 : i32
    %c0_i32_1 = arith.constant 0 : i32
    return %c0_i32, %c0_i32_0 : i32, i32
  }
  func.func @transform_5(%arg0: i32, %arg1: i32) -> (i32, i32) {
    %c0_i32 = arith.constant 0 : i32
    %c0_i32_0 = arith.constant 0 : i32
    %c0_i32_1 = arith.constant 0 : i32
    return %c0_i32, %c0_i32_0 : i32, i32
  }
  func.func @transform_6(%arg0: i32, %arg1: i32) -> (i32, i32) {
    %c0_i32 = arith.constant 0 : i32
    %c0_i32_0 = arith.constant 0 : i32
    return %arg0, %c0_i32 : i32, i32
  }
}

</mosaic_0001>

<llo_original>
// kernel: tpu_custom_call.1
$region0: #{tpu_custom_call.1}
  #allocation0 [shape = 'u32[]', space=smem, size = 0x4, offset = 0x4, fixed_abs, tag = 'smem constant byte address 0x4 - core index']
  #allocation1 [shape = 'u32[144,128]{1,0:T(1,128)}', space=vmem, size = 0x12000, scoped, tag = 'internal scratch']
  #allocation2 [shape = 'f32[128,128]{1,0:T(8,128)}', space=vmem, size = 0x10000, scoped, tag = 'scratch operand']
  %s0 = inlined_call_operand.hbm [shape: bf16[128,128], index: 0, kind: input, shape index: {}]
  %s1 = inlined_call_operand.hbm [shape: bf16[128,512], index: 1, kind: input, shape index: {}]
  %s2 = inlined_call_operand.hbm [shape: bf16[512,128], index: 2, kind: input, shape index: {}]
  %s3 = inlined_call_operand.hbm [shape: bf16[128,128], index: 3, kind: input, shape index: {}]
  %s4 = inlined_call_operand.hbm [shape: bf16[128,128], index: 4, kind: input, shape index: {}]
  %s5 = inlined_call_operand.hbm [shape: bf16[128,128], index: 5, kind: input, shape index: {}]
  %s6 = inlined_call_operand.hbm [shape: f32[128,128], index: 6, kind: output, shape index: {}]
  %s7 = sld [smem:[#allocation0]]
  $region89: #{tpu_custom_call.1} parent=0
    _
  %s9 = ssub.s32 1, %s7
  %s10 = scalar_select 0, %s9, %s7
  $region1: #{tpu_custom_call.1} parent=0
    #allocation3 [shape = 'u8[32768]{0}', space=vmem, size = 0x8000, scoped, tag = 'input window, operand 0, single buffered']
    #allocation4 [shape = 's32[2]{0}', space=sflag, size = 0x8, scoped, tag = 'scoped memory for tpu_custom_call.1']
    #allocation5 [shape = 's32[2]{0}', space=sflag, size = 0x8, scoped, tag = 'scoped memory for tpu_custom_call.1']
    #allocation6 [shape = 'u8[131072]{0}', space=vmem, size = 0x20000, scoped, tag = 'input window, operand 1']
    #allocation7 [shape = 's32[2]{0}', space=sflag, size = 0x8, scoped, tag = 'scoped memory for tpu_custom_call.1']
    #allocation8 [shape = 'u8[131072]{0}', space=vmem, size = 0x20000, scoped, tag = 'input window, operand 2']
    #allocation9 [shape = 'u8[32768]{0}', space=vmem, size = 0x8000, scoped, tag = 'input window, operand 3, single buffered']
    #allocation10 [shape = 's32[1]{0}', space=sflag, size = 0x4, scoped, tag = 'scoped memory for tpu_custom_call.1']
    #allocation11 [shape = 'u8[32768]{0}', space=vmem, size = 0x8000, scoped, tag = 'input window, operand 4, single buffered']
    #allocation12 [shape = 'u8[32768]{0}', space=vmem, size = 0x8000, scoped, tag = 'input window, operand 5, single buffered']
    #allocation13 [shape = 's32[1]{0}', space=sflag, size = 0x4, scoped, tag = 'scoped memory for tpu_custom_call.1']
    #allocation14 [shape = 'u8[65536]{0}', space=vmem, size = 0x10000, scoped, tag = 'output window, operand 0, single buffered']
    %11 = vsyncpa [#allocation4], 0
    %12 = vsyncpa [#allocation7], 0
    %s13 = scalar_lea.sflag [#allocation7], 1
    %14 = vsyncpa %s13, 0
    %15 = vsyncpa [#allocation10], 0
    %16 = vsyncpa [#allocation13], 0
    %17 = vsyncpa [#allocation5], 0
    loop: start=0, step=1, limit=4
    $region2: #{tpu_custom_call.1} parent=1 // loop_pre_header
      _
    $region3: #{tpu_custom_call.1} parent=1 // loop_header
      %s19 = sphi 0, %s23
      %p20 = scmp.ge.s32.totalorder %s19, 4
      %s26 = sphi 0, %s38
      %s27 = sphi 0, %s34
      %s28 = sphi 0, %s26
      %s29 = sphi 0, %s27
      %s30 = sphi 0, %s28
      %s31 = sphi 0, %s29
      %s41 = sphi 0, %s43
      %s44 = sphi 0, %s41
      %s45 = sphi 0, %s44
      %s61 = sphi 0, %s45
      %s69 = sphi 0, %s71
      %s72 = sphi 0, %s69
      %s73 = sphi 0, %s72
      %s89 = sphi 0, %s73
      %s95 = sphi 0, %s97
      %s98 = sphi 0, %s95
      %s99 = sphi 0, %s98
      %s115 = sphi 0, %s99
      %s119 = sphi 0, %s119
      %s121 = sphi 0, %s119
      %s122 = sphi 0, %s121
      %s136 = sphi 0, %s122
      %s140 = sphi 0, %s140
      %s142 = sphi 0, %s140
      %s143 = sphi 0, %s142
      %s157 = sphi 0, %s143
      %s161 = sphi 0, %s161
      %s163 = sphi 0, %s161
      %s164 = sphi 0, %s163
      %s178 = sphi 0, %s164
      %s184 = sphi 0, %s186
      %s187 = sphi 0, %s184
      %s188 = sphi 0, %s187
      %s204 = sphi 0, %s188
    $region4: #{tpu_custom_call.1} parent=1 // loop_header_branch
      %22 = sbr.rel (%p20) target = $region8
    $region5: #{tpu_custom_call.1} parent=1 // loop_body
      %s24 = ssub.s32 %s19, 1
      %s25 = ssub.s32 %s19, 2
      %s32 = sadd.s32 1, %s27
      %p33 = scmp.ge.s32.totalorder %s32, 2
      %s34 = scalar_select %p33, 0, %s32
      %s35 = sadd.s32 1, %s26
      %s36 = scalar_select %p33, %s35, %s26
      %p37 = scmp.ge.s32.totalorder %s36, 1
      %s38 = scalar_select %p37, 0, %s36
      %s39 = ssub.s32 %s26, %s38
      %p40 = scmp.eq.s32.totalorder %s39, 0
      %s42 = sadd.s32 %s41, 1
      %s43 = scalar_select %p40, %s41, %s42
      %p46 = pneg %p40
      %p47 = scmp.eq.s32.totalorder %s19, 1
      %p48 = por %p46, %p47
      %p49 = scmp.ne.s32.totalorder %s41, %s44
      %p50 = scmp.eq.s32.totalorder %s19, 0
      %p51 = por %p49, %p50
      %p52 = scmp.ne.s32.totalorder %s41, %s44
      %p53 = scmp.eq.s32.totalorder %s24, 1
      %p54 = por %p52, %p53
      %p55 = scmp.ne.s32.totalorder %s44, %s45
      %p56 = scmp.eq.s32.totalorder %s24, 0
      %p57 = por %p55, %p56
      %p58 = scmp.ne.s32.totalorder %s44, %s45
      %p59 = scmp.eq.s32.totalorder %s25, 1
      %p60 = por %p58, %p59
      %p62 = scmp.ne.s32.totalorder %s45, %s61
      %p63 = scmp.eq.s32.totalorder %s25, 0
      %p64 = por %p62, %p63
      %s65 = ssub.s32 %s26, %s38
      %s66 = ssub.s32 %s27, %s34
      %s67 = sor.u32 %s65, %s66
      %p68 = scmp.eq.s32.totalorder %s67, 0
      %s70 = sadd.s32 %s69, 1
      %s71 = scalar_select %p68, %s69, %s70
      %p74 = pneg %p68
      %p75 = scmp.eq.s32.totalorder %s19, 1
      %p76 = por %p74, %p75
      %p77 = scmp.ne.s32.totalorder %s69, %s72
      %p78 = scmp.eq.s32.totalorder %s19, 0
      %p79 = por %p77, %p78
      %p80 = scmp.ne.s32.totalorder %s69, %s72
      %p81 = scmp.eq.s32.totalorder %s24, 1
      %p82 = por %p80, %p81
      %p83 = scmp.ne.s32.totalorder %s72, %s73
      %p84 = scmp.eq.s32.totalorder %s24, 0
      %p85 = por %p83, %p84
      %p86 = scmp.ne.s32.totalorder %s72, %s73
      %p87 = scmp.eq.s32.totalorder %s25, 1
      %p88 = por %p86, %p87
      %p90 = scmp.ne.s32.totalorder %s73, %s89
      %p91 = scmp.eq.s32.totalorder %s25, 0
      %p92 = por %p90, %p91
      %s93 = ssub.s32 %s27, %s34
      %p94 = scmp.eq.s32.totalorder %s93, 0
      %s96 = sadd.s32 %s95, 1
      %s97 = scalar_select %p94, %s95, %s96
      %p100 = pneg %p94
      %p101 = scmp.eq.s32.totalorder %s19, 1
      %p102 = por %p100, %p101
      %p103 = scmp.ne.s32.totalorder %s95, %s98
      %p104 = scmp.eq.s32.totalorder %s19, 0
      %p105 = por %p103, %p104
      %p106 = scmp.ne.s32.totalorder %s95, %s98
      %p107 = scmp.eq.s32.totalorder %s24, 1
      %p108 = por %p106, %p107
      %p109 = scmp.ne.s32.totalorder %s98, %s99
      %p110 = scmp.eq.s32.totalorder %s24, 0
      %p111 = por %p109, %p110
      %p112 = scmp.ne.s32.totalorder %s98, %s99
      %p113 = scmp.eq.s32.totalorder %s25, 1
      %p114 = por %p112, %p113
      %p116 = scmp.ne.s32.totalorder %s99, %s115
      %p117 = scmp.eq.s32.totalorder %s25, 0
      %p118 = por %p116, %p117
      %s120 = sadd.s32 %s119, 1
      %p123 = scmp.eq.s32.totalorder %s19, 1
      %p124 = scmp.ne.s32.totalorder %s119, %s121
      %p125 = scmp.eq.s32.totalorder %s19, 0
      %p126 = por %p124, %p125
      %p127 = scmp.ne.s32.totalorder %s119, %s121
      %p128 = scmp.eq.s32.totalorder %s24, 1
      %p129 = por %p127, %p128
      %p130 = scmp.ne.s32.totalorder %s121, %s122
      %p131 = scmp.eq.s32.totalorder %s24, 0
      %p132 = por %p130, %p131
      %p133 = scmp.ne.s32.totalorder %s121, %s122
      %p134 = scmp.eq.s32.totalorder %s25, 1
      %p135 = por %p133, %p134
      %p137 = scmp.ne.s32.totalorder %s122, %s136
      %p138 = scmp.eq.s32.totalorder %s25, 0
      %p139 = por %p137, %p138
      %s141 = sadd.s32 %s140, 1
      %p144 = scmp.eq.s32.totalorder %s19, 1
      %p145 = scmp.ne.s32.totalorder %s140, %s142
      %p146 = scmp.eq.s32.totalorder %s19, 0
      %p147 = por %p145, %p146
      %p148 = scmp.ne.s32.totalorder %s140, %s142
      %p149 = scmp.eq.s32.totalorder %s24, 1
      %p150 = por %p148, %p149
      %p151 = scmp.ne.s32.totalorder %s142, %s143
      %p152 = scmp.eq.s32.totalorder %s24, 0
      %p153 = por %p151, %p152
      %p154 = scmp.ne.s32.totalorder %s142, %s143
      %p155 = scmp.eq.s32.totalorder %s25, 1
      %p156 = por %p154, %p155
      %p158 = scmp.ne.s32.totalorder %s143, %s157
      %p159 = scmp.eq.s32.totalorder %s25, 0
      %p160 = por %p158, %p159
      %s162 = sadd.s32 %s161, 1
      %p165 = scmp.eq.s32.totalorder %s19, 1
      %p166 = scmp.ne.s32.totalorder %s161, %s163
      %p167 = scmp.eq.s32.totalorder %s19, 0
      %p168 = por %p166, %p167
      %p169 = scmp.ne.s32.totalorder %s161, %s163
      %p170 = scmp.eq.s32.totalorder %s24, 1
      %p171 = por %p169, %p170
      %p172 = scmp.ne.s32.totalorder %s163, %s164
      %p173 = scmp.eq.s32.totalorder %s24, 0
      %p174 = por %p172, %p173
      %p175 = scmp.ne.s32.totalorder %s163, %s164
      %p176 = scmp.eq.s32.totalorder %s25, 1
      %p177 = por %p175, %p176
      %p179 = scmp.ne.s32.totalorder %s164, %s178
      %p180 = scmp.eq.s32.totalorder %s25, 0
      %p181 = por %p179, %p180
      %s182 = ssub.s32 %s26, %s38
      %p183 = scmp.eq.s32.totalorder %s182, 0
      %s185 = sadd.s32 %s184, 1
      %s186 = scalar_select %p183, %s184, %s185
      %p189 = pneg %p183
      %p190 = scmp.eq.s32.totalorder %s19, 1
      %p191 = por %p189, %p190
      %p192 = scmp.ne.s32.totalorder %s184, %s187
      %p193 = scmp.eq.s32.totalorder %s19, 0
      %p194 = por %p192, %p193
      %p195 = scmp.ne.s32.totalorder %s184, %s187
      %p196 = scmp.eq.s32.totalorder %s24, 1
      %p197 = por %p195, %p196
      %p198 = scmp.ne.s32.totalorder %s187, %s188
      %p199 = scmp.eq.s32.totalorder %s24, 0
      %p200 = por %p198, %p199
      %p201 = scmp.ne.s32.totalorder %s187, %s188
      %p202 = scmp.eq.s32.totalorder %s25, 1
      %p203 = por %p201, %p202
      %p205 = scmp.ne.s32.totalorder %s188, %s204
      %p206 = scmp.eq.s32.totalorder %s25, 0
      %p207 = por %p205, %p206
      %p208 = scmp.le.s32.totalorder 1, %s19
      %p209 = scmp.lt.s32.totalorder %s19, 3
      %p210 = pnand %p208, %p209
      %p211 = pneg %p210
      // Predicated region
      $region9: #{tpu_custom_call.1} parent=5 // pred_check
        _
      $region10: #{tpu_custom_call.1} parent=5 // pred_check_branch
        %213 = sbr.rel (%p210) target = $region12
      $region11: #{tpu_custom_call.1} parent=5 // pred_region
        %s214 = ssub.s32 %s19, 1
        // Predicated region
        $region13: #{tpu_custom_call.1} parent=11 // pred_check
          %p215 = pneg %p57
        $region14: #{tpu_custom_call.1} parent=11 // pred_check_branch
          %217 = sbr.rel (%p215) target = $region16
        $region15: #{tpu_custom_call.1} parent=11 // pred_region
          %s218 = smul.u32 16, %s28
          %s220 = ssub.s32 1024, 1024
          %221 = vsyncadd [#allocation4], %s220
          %s222 = smul.addr %s218, 64
          %s223 = scalar_lea.hbm %s0, %s222
          %s224 = sshll.u32 [#allocation3], 4
          %s225 = int_to_ptr.vmem [resolvable:$true] %s224
          %230 = dma.hbm_to_vmem [thread:$0]  %s223, 1024, %s225, [#allocation4], 64, 64, 4
        $region16: #{tpu_custom_call.1} parent=11 // pred_fallthru
          _
        // Predicated region
        $region17: #{tpu_custom_call.1} parent=11 // pred_check
          %p231 = pneg %p132
        $region18: #{tpu_custom_call.1} parent=11 // pred_check_branch
          %233 = sbr.rel (%p231) target = $region20
        $region19: #{tpu_custom_call.1} parent=11 // pred_region
          %s235 = ssub.s32 1024, 1024
          %236 = vsyncadd [#allocation10], %s235
          %s237 = sshll.u32 [#allocation9], 4
          %s238 = int_to_ptr.vmem [resolvable:$true] %s237
          %243 = dma.hbm_to_vmem [thread:$0]  %s3, 1024, %s238, [#allocation10], 64, 64, 4
        $region20: #{tpu_custom_call.1} parent=11 // pred_fallthru
          _
        // Predicated region
        $region21: #{tpu_custom_call.1} parent=11 // pred_check
          %p244 = pneg %p153
        $region22: #{tpu_custom_call.1} parent=11 // pred_check_branch
          %246 = sbr.rel (%p244) target = $region24
        $region23: #{tpu_custom_call.1} parent=11 // pred_region
          %s248 = ssub.s32 1024, 1024
          %249 = vsyncadd [#allocation10], %s248
          %s250 = sshll.u32 [#allocation11], 4
          %s251 = int_to_ptr.vmem [resolvable:$true] %s250
          %256 = dma.hbm_to_vmem [thread:$0]  %s4, 1024, %s251, [#allocation10], 64, 64, 4
        $region24: #{tpu_custom_call.1} parent=11 // pred_fallthru
          _
        // Predicated region
        $region25: #{tpu_custom_call.1} parent=11 // pred_check
          %p257 = pneg %p174
        $region26: #{tpu_custom_call.1} parent=11 // pred_check_branch
          %259 = sbr.rel (%p257) target = $region28
        $region27: #{tpu_custom_call.1} parent=11 // pred_region
          %s261 = ssub.s32 1024, 1024
          %262 = vsyncadd [#allocation13], %s261
          %s263 = sshll.u32 [#allocation12], 4
          %s264 = int_to_ptr.vmem [resolvable:$true] %s263
          %269 = dma.hbm_to_vmem [thread:$0]  %s5, 1024, %s264, [#allocation13], 64, 64, 4
        $region28: #{tpu_custom_call.1} parent=11 // pred_fallthru
          _
      $region12: #{tpu_custom_call.1} parent=5 // pred_fallthru
        _
      %p270 = scmp.lt.s32.totalorder %s19, 2
      // Predicated region
      $region29: #{tpu_custom_call.1} parent=5 // pred_check
        %p271 = pneg %p270
      $region30: #{tpu_custom_call.1} parent=5 // pred_check_branch
        %273 = sbr.rel (%p271) target = $region32
      $region31: #{tpu_custom_call.1} parent=5 // pred_region
        // Predicated region
        $region33: #{tpu_custom_call.1} parent=31 // pred_check
          %p274 = pneg %p79
        $region34: #{tpu_custom_call.1} parent=31 // pred_check_branch
          %276 = sbr.rel (%p274) target = $region36
        $region35: #{tpu_custom_call.1} parent=31 // pred_region
          %s277 = sand.u32 %s19, 1
          %s278 = scalar_lea.sflag [#allocation7], %s277
          %s279 = sand.u32 %s69, 1
          %s280 = smul.addr %s279, 128
          %s281 = scalar_lea.vmem [#allocation6], %s280
          %s282 = smul.u32 16, %s26
          %s283 = smul.u32 2, %s27
          %s285 = ssub.s32 2048, 2048
          %286 = vsyncadd %s278, %s285
          %s287 = smul.addr %s282, 4
          %s288 = sadd.s32 %s283, %s287
          %s289 = smul.addr %s288, 64
          %s290 = scalar_lea.hbm %s1, %s289
          %s291 = sshll.u32 %s281, 4
          %s292 = int_to_ptr.vmem [resolvable:$true] %s291
          %297 = dma.hbm_to_vmem [thread:$0]  %s290, 2048, %s292, %s278, 256, 128, 8
        $region36: #{tpu_custom_call.1} parent=31 // pred_fallthru
          _
        // Predicated region
        $region37: #{tpu_custom_call.1} parent=31 // pred_check
          %p298 = pneg %p105
        $region38: #{tpu_custom_call.1} parent=31 // pred_check_branch
          %300 = sbr.rel (%p298) target = $region40
        $region39: #{tpu_custom_call.1} parent=31 // pred_region
          %s301 = sand.u32 %s19, 1
          %s302 = scalar_lea.sflag [#allocation7], %s301
          %s303 = sand.u32 %s95, 1
          %s304 = smul.addr %s303, 128
          %s305 = scalar_lea.vmem [#allocation8], %s304
          %s306 = smul.u32 32, %s27
          %s308 = ssub.s32 2048, 2048
          %309 = vsyncadd %s302, %s308
          %s310 = smul.addr %s306, 64
          %s311 = scalar_lea.hbm %s2, %s310
          %s312 = sshll.u32 %s305, 4
          %s313 = int_to_ptr.vmem [resolvable:$true] %s312
          %318 = dma.hbm_to_vmem [thread:$0]  %s311, 2048, %s313, %s302, 64, 64, 4
        $region40: #{tpu_custom_call.1} parent=31 // pred_fallthru
          _
      $region32: #{tpu_custom_call.1} parent=5 // pred_fallthru
        _
      %p319 = scmp.le.s32.totalorder 1, %s19
      %p320 = scmp.lt.s32.totalorder %s19, 3
      %p321 = pnand %p319, %p320
      %p322 = pneg %p321
      // Predicated region
      $region41: #{tpu_custom_call.1} parent=5 // pred_check
        _
      $region42: #{tpu_custom_call.1} parent=5 // pred_check_branch
        %324 = sbr.rel (%p321) target = $region44
      $region43: #{tpu_custom_call.1} parent=5 // pred_region
        %s325 = ssub.s32 %s19, 1
        // Predicated region
        $region45: #{tpu_custom_call.1} parent=43 // pred_check
          %p326 = pneg %p57
        $region46: #{tpu_custom_call.1} parent=43 // pred_check_branch
          %328 = sbr.rel (%p326) target = $region48
        $region47: #{tpu_custom_call.1} parent=43 // pred_region
          %329 = dma.done [#allocation4], 1024
        $region48: #{tpu_custom_call.1} parent=43 // pred_fallthru
          _
        %s330 = sand.u32 %s24, 1
        %s331 = scalar_lea.sflag [#allocation7], %s330
        %s332 = sand.u32 %s72, 1
        %s333 = smul.addr %s332, 128
        %s334 = scalar_lea.vmem [#allocation6], %s333
        // Predicated region
        $region49: #{tpu_custom_call.1} parent=43 // pred_check
          %p335 = pneg %p85
        $region50: #{tpu_custom_call.1} parent=43 // pred_check_branch
          %337 = sbr.rel (%p335) target = $region52
        $region51: #{tpu_custom_call.1} parent=43 // pred_region
          %338 = dma.done %s331, 2048
        $region52: #{tpu_custom_call.1} parent=43 // pred_fallthru
          _
        %s339 = sand.u32 %s24, 1
        %s340 = scalar_lea.sflag [#allocation7], %s339
        %s341 = sand.u32 %s98, 1
        %s342 = smul.addr %s341, 128
        %s343 = scalar_lea.vmem [#allocation8], %s342
        // Predicated region
        $region53: #{tpu_custom_call.1} parent=43 // pred_check
          %p344 = pneg %p111
        $region54: #{tpu_custom_call.1} parent=43 // pred_check_branch
          %346 = sbr.rel (%p344) target = $region56
        $region55: #{tpu_custom_call.1} parent=43 // pred_region
          %347 = dma.done %s340, 2048
        $region56: #{tpu_custom_call.1} parent=43 // pred_fallthru
          _
        // Predicated region
        $region57: #{tpu_custom_call.1} parent=43 // pred_check
          %p348 = pneg %p132
        $region58: #{tpu_custom_call.1} parent=43 // pred_check_branch
          %350 = sbr.rel (%p348) target = $region60
        $region59: #{tpu_custom_call.1} parent=43 // pred_region
          %351 = dma.done [#allocation10], 1024
        $region60: #{tpu_custom_call.1} parent=43 // pred_fallthru
          _
        // Predicated region
        $region61: #{tpu_custom_call.1} parent=43 // pred_check
          %p352 = pneg %p153
        $region62: #{tpu_custom_call.1} parent=43 // pred_check_branch
          %354 = sbr.rel (%p352) target = $region64
        $region63: #{tpu_custom_call.1} parent=43 // pred_region
          %355 = dma.done [#allocation10], 1024
        $region64: #{tpu_custom_call.1} parent=43 // pred_fallthru
          _
        // Predicated region
        $region65: #{tpu_custom_call.1} parent=43 // pred_check
          %p356 = pneg %p174
        $region66: #{tpu_custom_call.1} parent=43 // pred_check_branch
          %358 = sbr.rel (%p356) target = $region68
        $region67: #{tpu_custom_call.1} parent=43 // pred_region
          %359 = dma.done [#allocation13], 1024
        $region68: #{tpu_custom_call.1} parent=43 // pred_fallthru
          _
        %p360 = pneg %p57
        %p361 = pneg %p54
        %s362 = sand.u32 %s24, 1
        %s363 = scalar_lea.sflag [#allocation7], %s362
        %s364 = sand.u32 %s72, 1
        %s365 = smul.addr %s364, 128
        %s366 = scalar_lea.vmem [#allocation6], %s365
        %p367 = pneg %p85
        %p368 = pneg %p82
        %s369 = sand.u32 %s24, 1
        %s370 = scalar_lea.sflag [#allocation7], %s369
        %s371 = sand.u32 %s98, 1
        %s372 = smul.addr %s371, 128
        %s373 = scalar_lea.vmem [#allocation8], %s372
        %p374 = pneg %p111
        %p375 = pneg %p108
        %p376 = pneg %p132
        %p377 = pneg %p129
        %p378 = pneg %p153
        %p379 = pneg %p150
        %p380 = pneg %p174
        %p381 = pneg %p171
        %p382 = pneg %p200
        %p383 = pneg %p197
        %s384 = smul.u32 16, %s28
        %s385 = smul.u32 16, %s28
        %s386 = smul.u32 2, %s29
        %s387 = smul.u32 32, %s29
        %s388 = smul.u32 16, %s28
        %p390 = scmp.eq.s32.totalorder %s29, 0
        // Predicated region
        $region69: #{tpu_custom_call.1} parent=43 // pred_check
          %p391 = pneg %p390
        $region70: #{tpu_custom_call.1} parent=43 // pred_check_branch
          %393 = sbr.rel (%p391) target = $region72
        $region71: #{tpu_custom_call.1} parent=43 // pred_region
          %394 = vst [vmem:[#allocation2] sm:$0xff] 0.0
          %395 = vst [vmem:[#allocation2 + $0x8] sm:$0xff] 0.0
          %396 = vst [vmem:[#allocation2 + $0x10] sm:$0xff] 0.0
          %397 = vst [vmem:[#allocation2 + $0x18] sm:$0xff] 0.0
          %398 = vst [vmem:[#allocation2 + $0x20] sm:$0xff] 0.0
          %399 = vst [vmem:[#allocation2 + $0x28] sm:$0xff] 0.0
          %400 = vst [vmem:[#allocation2 + $0x30] sm:$0xff] 0.0
          %401 = vst [vmem:[#allocation2 + $0x38] sm:$0xff] 0.0
          %402 = vst [vmem:[#allocation2 + $0x40] sm:$0xff] 0.0
          %403 = vst [vmem:[#allocation2 + $0x48] sm:$0xff] 0.0
          %404 = vst [vmem:[#allocation2 + $0x50] sm:$0xff] 0.0
          %405 = vst [vmem:[#allocation2 + $0x58] sm:$0xff] 0.0
          %406 = vst [vmem:[#allocation2 + $0x60] sm:$0xff] 0.0
          %407 = vst [vmem:[#allocation2 + $0x68] sm:$0xff] 0.0
          %408 = vst [vmem:[#allocation2 + $0x70] sm:$0xff] 0.0
          %409 = vst [vmem:[#allocation2 + $0x78] sm:$0xff] 0.0
        $region72: #{tpu_custom_call.1} parent=43 // pred_fallthru
          _
        %v410 = vld [vmem:[#allocation2] sm:$0xff]
        %v411 = vld [vmem:[#allocation2 + $0x8] sm:$0xff]
        %v412 = vld [vmem:[#allocation2 + $0x10] sm:$0xff]
        %v413 = vld [vmem:[#allocation2 + $0x18] sm:$0xff]
        %v414 = vld [vmem:[#allocation2 + $0x20] sm:$0xff]
        %v415 = vld [vmem:[#allocation2 + $0x28] sm:$0xff]
        %v416 = vld [vmem:[#allocation2 + $0x30] sm:$0xff]
        %v417 = vld [vmem:[#allocation2 + $0x38] sm:$0xff]
        %v418 = vld [vmem:[#allocation2 + $0x40] sm:$0xff]
        %v419 = vld [vmem:[#allocation2 + $0x48] sm:$0xff]
        %v420 = vld [vmem:[#allocation2 + $0x50] sm:$0xff]
        %v421 = vld [vmem:[#allocation2 + $0x58] sm:$0xff]
        %v422 = vld [vmem:[#allocation2 + $0x60] sm:$0xff]
        %v423 = vld [vmem:[#allocation2 + $0x68] sm:$0xff]
        %v424 = vld [vmem:[#allocation2 + $0x70] sm:$0xff]
        %v425 = vld [vmem:[#allocation2 + $0x78] sm:$0xff]
        %v426 = vld [vmem:[%s334] sm:$0xff]
        %v427 = vld [vmem:[%s334 + $0x8] sm:$0xff]
        %v428 = vld [vmem:[%s334 + $0x10] sm:$0xff]
        %v429 = vld [vmem:[%s334 + $0x18] sm:$0xff]
        %v430 = vld [vmem:[%s334 + $0x20] sm:$0xff]
        %v431 = vld [vmem:[%s334 + $0x28] sm:$0xff]
        %v432 = vld [vmem:[%s334 + $0x30] sm:$0xff]
        %v433 = vld [vmem:[%s334 + $0x38] sm:$0xff]
        %v434 = vld [vmem:[%s334 + $0x40] sm:$0xff]
        %v435 = vld [vmem:[%s334 + $0x48] sm:$0xff]
        %v436 = vld [vmem:[%s334 + $0x50] sm:$0xff]
        %v437 = vld [vmem:[%s334 + $0x58] sm:$0xff]
        %v438 = vld [vmem:[%s334 + $0x60] sm:$0xff]
        %v439 = vld [vmem:[%s334 + $0x68] sm:$0xff]
        %v440 = vld [vmem:[%s334 + $0x70] sm:$0xff]
        %v441 = vld [vmem:[%s334 + $0x78] sm:$0xff]
        %v442 = vld [vmem:[%s343] sm:$0xf]
        %v443 = vld [vmem:[%s343 + $0x4] sm:$0xf]
        %v444 = vld [vmem:[%s343 + $0x8] sm:$0xf]
        %v445 = vld [vmem:[%s343 + $0xc] sm:$0xf]
        %v446 = vld [vmem:[%s343 + $0x10] sm:$0xf]
        %v447 = vld [vmem:[%s343 + $0x14] sm:$0xf]
        %v448 = vld [vmem:[%s343 + $0x18] sm:$0xf]
        %v449 = vld [vmem:[%s343 + $0x1c] sm:$0xf]
        %v450 = vld [vmem:[%s343 + $0x20] sm:$0xf]
        %v451 = vld [vmem:[%s343 + $0x24] sm:$0xf]
        %v452 = vld [vmem:[%s343 + $0x28] sm:$0xf]
        %v453 = vld [vmem:[%s343 + $0x2c] sm:$0xf]
        %v454 = vld [vmem:[%s343 + $0x30] sm:$0xf]
        %v455 = vld [vmem:[%s343 + $0x34] sm:$0xf]
        %v456 = vld [vmem:[%s343 + $0x38] sm:$0xf]
        %v457 = vld [vmem:[%s343 + $0x3c] sm:$0xf]
        %v458 = vld [vmem:[%s343 + $0x40] sm:$0xf]
        %v459 = vld [vmem:[%s343 + $0x44] sm:$0xf]
        %v460 = vld [vmem:[%s343 + $0x48] sm:$0xf]
        %v461 = vld [vmem:[%s343 + $0x4c] sm:$0xf]
        %v462 = vld [vmem:[%s343 + $0x50] sm:$0xf]
        %v463 = vld [vmem:[%s343 + $0x54] sm:$0xf]
        %v464 = vld [vmem:[%s343 + $0x58] sm:$0xf]
        %v465 = vld [vmem:[%s343 + $0x5c] sm:$0xf]
        %v466 = vld [vmem:[%s343 + $0x60] sm:$0xf]
        %v467 = vld [vmem:[%s343 + $0x64] sm:$0xf]
        %v468 = vld [vmem:[%s343 + $0x68] sm:$0xf]
        %v469 = vld [vmem:[%s343 + $0x6c] sm:$0xf]
        %v470 = vld [vmem:[%s343 + $0x70] sm:$0xf]
        %v471 = vld [vmem:[%s343 + $0x74] sm:$0xf]
        %v472 = vld [vmem:[%s343 + $0x78] sm:$0xf]
        %v473 = vld [vmem:[%s343 + $0x7c] sm:$0xf]
        %v490 = vunpack.c.l.b16 %v426
        %v491 = vunpack.c.h.b16 %v426
        %v492 = vunpack.c.l.b16 %v427
        %v493 = vunpack.c.h.b16 %v427
        %v494 = vunpack.c.l.b16 %v428
        %v495 = vunpack.c.h.b16 %v428
        %v496 = vunpack.c.l.b16 %v429
        %v497 = vunpack.c.h.b16 %v429
        %v498 = vunpack.c.l.b16 %v430
        %v499 = vunpack.c.h.b16 %v430
        %v500 = vunpack.c.l.b16 %v431
        %v501 = vunpack.c.h.b16 %v431
        %v502 = vunpack.c.l.b16 %v432
        %v503 = vunpack.c.h.b16 %v432
        %v504 = vunpack.c.l.b16 %v433
        %v505 = vunpack.c.h.b16 %v433
        %v506 = vunpack.c.l.b16 %v434
        %v507 = vunpack.c.h.b16 %v434
        %v508 = vunpack.c.l.b16 %v435
        %v509 = vunpack.c.h.b16 %v435
        %v510 = vunpack.c.l.b16 %v436
        %v511 = vunpack.c.h.b16 %v436
        %v512 = vunpack.c.l.b16 %v437
        %v513 = vunpack.c.h.b16 %v437
        %v514 = vunpack.c.l.b16 %v438
        %v515 = vunpack.c.h.b16 %v438
        %v516 = vunpack.c.l.b16 %v439
        %v517 = vunpack.c.h.b16 %v439
        %v518 = vunpack.c.l.b16 %v440
        %v519 = vunpack.c.h.b16 %v440
        %v520 = vunpack.c.l.b16 %v441
        %v521 = vunpack.c.h.b16 %v441
        %v522 = vpack.c.b16 %v492, %v490
        %v523 = vpack.c.b16 %v493, %v491
        %v524 = vpack.c.b16 %v496, %v494
        %v525 = vpack.c.b16 %v497, %v495
        %v526 = vpack.c.b16 %v500, %v498
        %v527 = vpack.c.b16 %v501, %v499
        %v528 = vpack.c.b16 %v504, %v502
        %v529 = vpack.c.b16 %v505, %v503
        %v530 = vpack.c.b16 %v508, %v506
        %v531 = vpack.c.b16 %v509, %v507
        %v532 = vpack.c.b16 %v512, %v510
        %v533 = vpack.c.b16 %v513, %v511
        %v534 = vpack.c.b16 %v516, %v514
        %v535 = vpack.c.b16 %v517, %v515
        %v536 = vpack.c.b16 %v520, %v518
        %v537 = vpack.c.b16 %v521, %v519
        %v586 = vunpack.c.l.b16 %v442
        %v587 = vunpack.c.l.b16 %v443
        %v588 = vunpack.c.l.b16 %v444
        %v589 = vunpack.c.l.b16 %v445
        %v590 = vunpack.c.l.b16 %v446
        %v591 = vunpack.c.l.b16 %v447
        %v592 = vunpack.c.l.b16 %v448
        %v593 = vunpack.c.l.b16 %v449
        %v594 = vunpack.c.l.b16 %v450
        %v595 = vunpack.c.l.b16 %v451
        %v596 = vunpack.c.l.b16 %v452
        %v597 = vunpack.c.l.b16 %v453
        %v598 = vunpack.c.l.b16 %v454
        %v599 = vunpack.c.l.b16 %v455
        %v600 = vunpack.c.l.b16 %v456
        %v601 = vunpack.c.l.b16 %v457
        %v602 = vunpack.c.l.b16 %v458
        %v603 = vunpack.c.l.b16 %v459
        %v604 = vunpack.c.l.b16 %v460
        %v605 = vunpack.c.l.b16 %v461
        %v606 = vunpack.c.l.b16 %v462
        %v607 = vunpack.c.l.b16 %v463
        %v608 = vunpack.c.l.b16 %v464
        %v609 = vunpack.c.l.b16 %v465
        %v610 = vunpack.c.l.b16 %v466
        %v611 = vunpack.c.l.b16 %v467
        %v612 = vunpack.c.l.b16 %v468
        %v613 = vunpack.c.l.b16 %v469
        %v614 = vunpack.c.l.b16 %v470
        %v615 = vunpack.c.l.b16 %v471
        %v616 = vunpack.c.l.b16 %v472
        %v617 = vunpack.c.l.b16 %v473
        %v618 = vpack.c.b16 %v587, %v586
        %v619 = vpack.c.b16 %v589, %v588
        %v620 = vpack.c.b16 %v591, %v590
        %v621 = vpack.c.b16 %v593, %v592
        %v622 = vpack.c.b16 %v595, %v594
        %v623 = vpack.c.b16 %v597, %v596
        %v624 = vpack.c.b16 %v599, %v598
        %v625 = vpack.c.b16 %v601, %v600
        %v626 = vpack.c.b16 %v603, %v602
        %v627 = vpack.c.b16 %v605, %v604
        %v628 = vpack.c.b16 %v607, %v606
        %v629 = vpack.c.b16 %v609, %v608
        %v630 = vpack.c.b16 %v611, %v610
        %v631 = vpack.c.b16 %v613, %v612
        %v632 = vpack.c.b16 %v615, %v614
        %v633 = vpack.c.b16 %v617, %v616
        %650 = vmatprep.subr.bf16.mxu0 0
        %651 = vmatpush1.bf16.msra.mxu0 %v618
        %652 = vmatprep.subr.bf16.mxu0 0
        %653 = vmatpush1.bf16.msra.mxu0 %v619
        %654 = vmatprep.subr.bf16.mxu0 0
        %655 = vmatpush1.bf16.msra.mxu0 %v620
        %656 = vmatprep.subr.bf16.mxu0 0
        %657 = vmatpush1.bf16.msra.mxu0 %v621
        %658 = vmatprep.subr.bf16.mxu0 0
        %659 = vmatpush1.bf16.msra.mxu0 %v622
        %660 = vmatprep.subr.bf16.mxu0 0
        %661 = vmatpush1.bf16.msra.mxu0 %v623
        %662 = vmatprep.subr.bf16.mxu0 0
        %663 = vmatpush1.bf16.msra.mxu0 %v624
        %664 = vmatprep.subr.bf16.mxu0 0
        %665 = vmatpush1.bf16.msra.mxu0 %v625
        %666 = vmatprep.subr.bf16.mxu0 0
        %667 = vmatpush1.bf16.msra.mxu0 %v626
        %668 = vmatprep.subr.bf16.mxu0 0
        %669 = vmatpush1.bf16.msra.mxu0 %v627
        %670 = vmatprep.subr.bf16.mxu0 0
        %671 = vmatpush1.bf16.msra.mxu0 %v628
        %672 = vmatprep.subr.bf16.mxu0 0
        %673 = vmatpush1.bf16.msra.mxu0 %v629
        %674 = vmatprep.subr.bf16.mxu0 0
        %675 = vmatpush1.bf16.msra.mxu0 %v630
        %676 = vmatprep.subr.bf16.mxu0 0
        %677 = vmatpush1.bf16.msra.mxu0 %v631
        %678 = vmatprep.subr.bf16.mxu0 0
        %679 = vmatpush1.bf16.msra.mxu0 %v632
        %680 = vmatprep.subr.bf16.mxu0 0
        %681 = vmatpush1.bf16.msra.mxu0 %v633
        %682 = vmatprep.mubr.bf16.mxu0 %v523
        %683 = vmatmul.mubr.bf16.gmra.mrb[0].mxu0 %v522
        %v684 = vpop.f32.mrb[0].mxu0
        %v685 = vadd.f32 0.0, %v684
        %v686 = vpop.f32.mrb[0].mxu0
        %v687 = vpop.f32.mrb[0].mxu0
        %v688 = vadd.f32 0.0, %v687
        %v689 = vpop.f32.mrb[0].mxu0
        %690 = vmatprep.mubr.bf16.mxu0 %v525
        %691 = vmatmul.mubr.bf16.gmra.mrb[0].mxu0 %v524
        %v692 = vpop.f32.mrb[0].mxu0
        %v693 = vadd.f32 0.0, %v692
        %v694 = vpop.f32.mrb[0].mxu0
        %v695 = vpop.f32.mrb[0].mxu0
        %v696 = vadd.f32 0.0, %v695
        %v697 = vpop.f32.mrb[0].mxu0
        %698 = vmatprep.mubr.bf16.mxu0 %v527
        %699 = vmatmul.mubr.bf16.gmra.mrb[0].mxu0 %v526
        %v700 = vpop.f32.mrb[0].mxu0
        %v701 = vadd.f32 0.0, %v700
        %v702 = vpop.f32.mrb[0].mxu0
        %v703 = vpop.f32.mrb[0].mxu0
        %v704 = vadd.f32 0.0, %v703
        %v705 = vpop.f32.mrb[0].mxu0
        %706 = vmatprep.mubr.bf16.mxu0 %v529
        %707 = vmatmul.mubr.bf16.gmra.mrb[0].mxu0 %v528
        %v708 = vpop.f32.mrb[0].mxu0
        %v709 = vadd.f32 0.0, %v708
        %v710 = vpop.f32.mrb[0].mxu0
        %v711 = vpop.f32.mrb[0].mxu0
        %v712 = vadd.f32 0.0, %v711
        %v713 = vpop.f32.mrb[0].mxu0
        %714 = vmatprep.mubr.bf16.mxu0 %v531
        %715 = vmatmul.mubr.bf16.gmra.mrb[0].mxu0 %v530
        %v716 = vpop.f32.mrb[0].mxu0
        %v717 = vadd.f32 0.0, %v716
        %v718 = vpop.f32.mrb[0].mxu0
        %v719 = vpop.f32.mrb[0].mxu0
        %v720 = vadd.f32 0.0, %v719
        %v721 = vpop.f32.mrb[0].mxu0
        %722 = vmatprep.mubr.bf16.mxu0 %v533
        %723 = vmatmul.mubr.bf16.gmra.mrb[0].mxu0 %v532
        %v724 = vpop.f32.mrb[0].mxu0
        %v725 = vadd.f32 0.0, %v724
        %v726 = vpop.f32.mrb[0].mxu0
        %v727 = vpop.f32.mrb[0].mxu0
        %v728 = vadd.f32 0.0, %v727
        %v729 = vpop.f32.mrb[0].mxu0
        %730 = vmatprep.mubr.bf16.mxu0 %v535
        %731 = vmatmul.mubr.bf16.gmra.mrb[0].mxu0 %v534
        %v732 = vpop.f32.mrb[0].mxu0
        %v733 = vadd.f32 0.0, %v732
        %v734 = vpop.f32.mrb[0].mxu0
        %v735 = vpop.f32.mrb[0].mxu0
        %v736 = vadd.f32 0.0, %v735
        %v737 = vpop.f32.mrb[0].mxu0
        %738 = vmatprep.mubr.bf16.mxu0 %v537
        %739 = vmatmul.mubr.bf16.gmra.mrb[0].mxu0 %v536
        %v740 = vpop.f32.mrb[0].mxu0
        %v741 = vadd.f32 0.0, %v740
        %v742 = vpop.f32.mrb[0].mxu0
        %v743 = vpop.f32.mrb[0].mxu0
        %v744 = vadd.f32 0.0, %v743
        %v745 = vpop.f32.mrb[0].mxu0
        %746 = vdwg.mxu0
        %v747 = vadd.f32 %v410, %v685
        %v748 = vadd.f32 %v411, %v688
        %v749 = vadd.f32 %v412, %v693
        %v750 = vadd.f32 %v413, %v696
        %v751 = vadd.f32 %v414, %v701
        %v752 = vadd.f32 %v415, %v704
        %v753 = vadd.f32 %v416, %v709
        %v754 = vadd.f32 %v417, %v712
        %v755 = vadd.f32 %v418, %v717
        %v756 = vadd.f32 %v419, %v720
        %v757 = vadd.f32 %v420, %v725
        %v758 = vadd.f32 %v421, %v728
        %v759 = vadd.f32 %v422, %v733
        %v760 = vadd.f32 %v423, %v736
        %v761 = vadd.f32 %v424, %v741
        %v762 = vadd.f32 %v425, %v744
        %763 = vst [vmem:[#allocation2] sm:$0xff] %v747
        %764 = vst [vmem:[#allocation2 + $0x8] sm:$0xff] %v748
        %765 = vst [vmem:[#allocation2 + $0x10] sm:$0xff] %v749
        %766 = vst [vmem:[#allocation2 + $0x18] sm:$0xff] %v750
        %767 = vst [vmem:[#allocation2 + $0x20] sm:$0xff] %v751
        %768 = vst [vmem:[#allocation2 + $0x28] sm:$0xff] %v752
        %769 = vst [vmem:[#allocation2 + $0x30] sm:$0xff] %v753
        %770 = vst [vmem:[#allocation2 + $0x38] sm:$0xff] %v754
        %771 = vst [vmem:[#allocation2 + $0x40] sm:$0xff] %v755
        %772 = vst [vmem:[#allocation2 + $0x48] sm:$0xff] %v756
        %773 = vst [vmem:[#allocation2 + $0x50] sm:$0xff] %v757
        %774 = vst [vmem:[#allocation2 + $0x58] sm:$0xff] %v758
        %775 = vst [vmem:[#allocation2 + $0x60] sm:$0xff] %v759
        %776 = vst [vmem:[#allocation2 + $0x68] sm:$0xff] %v760
        %777 = vst [vmem:[#allocation2 + $0x70] sm:$0xff] %v761
        %778 = vst [vmem:[#allocation2 + $0x78] sm:$0xff] %v762
        %p779 = scmp.eq.s32.totalorder %s29, 1
        // Predicated region
        $region73: #{tpu_custom_call.1} parent=43 // pred_check
          %p780 = pneg %p779
        $region74: #{tpu_custom_call.1} parent=43 // pred_check_branch
          %782 = sbr.rel (%p780) target = $region76
        $region75: #{tpu_custom_call.1} parent=43 // pred_region
          %v783 = vld [vmem:[#allocation3] sm:$0xf]
          %v784 = vld [vmem:[#allocation3 + $0x4] sm:$0xf]
          %v785 = vld [vmem:[#allocation3 + $0x8] sm:$0xf]
          %v786 = vld [vmem:[#allocation3 + $0xc] sm:$0xf]
          %v787 = vld [vmem:[#allocation3 + $0x10] sm:$0xf]
          %v788 = vld [vmem:[#allocation3 + $0x14] sm:$0xf]
          %v789 = vld [vmem:[#allocation3 + $0x18] sm:$0xf]
          %v790 = vld [vmem:[#allocation3 + $0x1c] sm:$0xf]
          %v791 = vld [vmem:[#allocation3 + $0x20] sm:$0xf]
          %v792 = vld [vmem:[#allocation3 + $0x24] sm:$0xf]
          %v793 = vld [vmem:[#allocation3 + $0x28] sm:$0xf]
          %v794 = vld [vmem:[#allocation3 + $0x2c] sm:$0xf]
          %v795 = vld [vmem:[#allocation3 + $0x30] sm:$0xf]
          %v796 = vld [vmem:[#allocation3 + $0x34] sm:$0xf]
          %v797 = vld [vmem:[#allocation3 + $0x38] sm:$0xf]
          %v798 = vld [vmem:[#allocation3 + $0x3c] sm:$0xf]
          %v799 = vld [vmem:[#allocation9] sm:$0xf]
          %v800 = vld [vmem:[#allocation9 + $0x4] sm:$0xf]
          %v801 = vld [vmem:[#allocation9 + $0x8] sm:$0xf]
          %v802 = vld [vmem:[#allocation9 + $0xc] sm:$0xf]
          %v803 = vld [vmem:[#allocation9 + $0x10] sm:$0xf]
          %v804 = vld [vmem:[#allocation9 + $0x14] sm:$0xf]
          %v805 = vld [vmem:[#allocation9 + $0x18] sm:$0xf]
          %v806 = vld [vmem:[#allocation9 + $0x1c] sm:$0xf]
          %v807 = vld [vmem:[#allocation9 + $0x20] sm:$0xf]
          %v808 = vld [vmem:[#allocation9 + $0x24] sm:$0xf]
          %v809 = vld [vmem:[#allocation9 + $0x28] sm:$0xf]
          %v810 = vld [vmem:[#allocation9 + $0x2c] sm:$0xf]
          %v811 = vld [vmem:[#allocation9 + $0x30] sm:$0xf]
          %v812 = vld [vmem:[#allocation9 + $0x34] sm:$0xf]
          %v813 = vld [vmem:[#allocation9 + $0x38] sm:$0xf]
          %v814 = vld [vmem:[#allocation9 + $0x3c] sm:$0xf]
          %v815 = vld [vmem:[#allocation2] sm:$0xff]
          %v816 = vld [vmem:[#allocation2 + $0x8] sm:$0xff]
          %v817 = vld [vmem:[#allocation2 + $0x10] sm:$0xff]
          %v818 = vld [vmem:[#allocation2 + $0x18] sm:$0xff]
          %v819 = vld [vmem:[#allocation2 + $0x20] sm:$0xff]
          %v820 = vld [vmem:[#allocation2 + $0x28] sm:$0xff]
          %v821 = vld [vmem:[#allocation2 + $0x30] sm:$0xff]
          %v822 = vld [vmem:[#allocation2 + $0x38] sm:$0xff]
          %v823 = vld [vmem:[#allocation2 + $0x40] sm:$0xff]
          %v824 = vld [vmem:[#allocation2 + $0x48] sm:$0xff]
          %v825 = vld [vmem:[#allocation2 + $0x50] sm:$0xff]
          %v826 = vld [vmem:[#allocation2 + $0x58] sm:$0xff]
          %v827 = vld [vmem:[#allocation2 + $0x60] sm:$0xff]
          %v828 = vld [vmem:[#allocation2 + $0x68] sm:$0xff]
          %v829 = vld [vmem:[#allocation2 + $0x70] sm:$0xff]
          %v830 = vld [vmem:[#allocation2 + $0x78] sm:$0xff]
          %v831 = vpack.c.bf16 %v816, %v815
          %v832 = vpack.c.bf16 %v818, %v817
          %v833 = vpack.c.bf16 %v820, %v819
          %v834 = vpack.c.bf16 %v822, %v821
          %v835 = vpack.c.bf16 %v824, %v823
          %v836 = vpack.c.bf16 %v826, %v825
          %v837 = vpack.c.bf16 %v828, %v827
          %v838 = vpack.c.bf16 %v830, %v829
          %v839 = vld [vmem:[#allocation11] sm:$0xf]
          %v840 = vld [vmem:[#allocation11 + $0x4] sm:$0xf]
          %v841 = vld [vmem:[#allocation11 + $0x8] sm:$0xf]
          %v842 = vld [vmem:[#allocation11 + $0xc] sm:$0xf]
          %v843 = vld [vmem:[#allocation11 + $0x10] sm:$0xf]
          %v844 = vld [vmem:[#allocation11 + $0x14] sm:$0xf]
          %v845 = vld [vmem:[#allocation11 + $0x18] sm:$0xf]
          %v846 = vld [vmem:[#allocation11 + $0x1c] sm:$0xf]
          %v847 = vld [vmem:[#allocation11 + $0x20] sm:$0xf]
          %v848 = vld [vmem:[#allocation11 + $0x24] sm:$0xf]
          %v849 = vld [vmem:[#allocation11 + $0x28] sm:$0xf]
          %v850 = vld [vmem:[#allocation11 + $0x2c] sm:$0xf]
          %v851 = vld [vmem:[#allocation11 + $0x30] sm:$0xf]
          %v852 = vld [vmem:[#allocation11 + $0x34] sm:$0xf]
          %v853 = vld [vmem:[#allocation11 + $0x38] sm:$0xf]
          %v854 = vld [vmem:[#allocation11 + $0x3c] sm:$0xf]
          %v871 = vunpack.c.l.b16 %v839
          %v872 = vunpack.c.l.b16 %v840
          %v873 = vunpack.c.l.b16 %v841
          %v874 = vunpack.c.l.b16 %v842
          %v875 = vunpack.c.l.b16 %v843
          %v876 = vunpack.c.l.b16 %v844
          %v877 = vunpack.c.l.b16 %v845
          %v878 = vunpack.c.l.b16 %v846
          %v879 = vunpack.c.l.b16 %v847
          %v880 = vunpack.c.l.b16 %v848
          %v881 = vunpack.c.l.b16 %v849
          %v882 = vunpack.c.l.b16 %v850
          %v883 = vunpack.c.l.b16 %v851
          %v884 = vunpack.c.l.b16 %v852
          %v885 = vunpack.c.l.b16 %v853
          %v886 = vunpack.c.l.b16 %v854
          %v887 = vpack.c.b16 %v872, %v871
          %v888 = vpack.c.b16 %v874, %v873
          %v889 = vpack.c.b16 %v876, %v875
          %v890 = vpack.c.b16 %v878, %v877
          %v891 = vpack.c.b16 %v880, %v879
          %v892 = vpack.c.b16 %v882, %v881
          %v893 = vpack.c.b16 %v884, %v883
          %v894 = vpack.c.b16 %v886, %v885
          %903 = vmatprep.subr.bf16.mxu0 0
          %904 = vmatpush1.bf16.msra.mxu0 %v887
          %905 = vmatprep.subr.bf16.mxu0 0
          %906 = vmatpush1.bf16.msra.mxu0 %v888
          %907 = vmatprep.subr.bf16.mxu0 0
          %908 = vmatpush1.bf16.msra.mxu0 %v889
          %909 = vmatprep.subr.bf16.mxu0 0
          %910 = vmatpush1.bf16.msra.mxu0 %v890
          %911 = vmatprep.subr.bf16.mxu0 0
          %912 = vmatpush1.bf16.msra.mxu0 %v891
          %913 = vmatprep.subr.bf16.mxu0 0
          %914 = vmatpush1.bf16.msra.mxu0 %v892
          %915 = vmatprep.subr.bf16.mxu0 0
          %916 = vmatpush1.bf16.msra.mxu0 %v893
          %917 = vmatprep.subr.bf16.mxu0 0
          %918 = vmatpush1.bf16.msra.mxu0 %v894
          %919 = vmatprep.subr.bf16.mxu0 0
          %920 = vmatpush1.bf16.msra.mxu0 0
          %921 = vmatprep.subr.bf16.mxu0 0
          %922 = vmatpush1.bf16.msra.mxu0 0
          %923 = vmatprep.subr.bf16.mxu0 0
          %924 = vmatpush1.bf16.msra.mxu0 0
          %925 = vmatprep.subr.bf16.mxu0 0
          %926 = vmatpush1.bf16.msra.mxu0 0
          %927 = vmatprep.subr.bf16.mxu0 0
          %928 = vmatpush1.bf16.msra.mxu0 0
          %929 = vmatprep.subr.bf16.mxu0 0
          %930 = vmatpush1.bf16.msra.mxu0 0
          %931 = vmatprep.subr.bf16.mxu0 0
          %932 = vmatpush1.bf16.msra.mxu0 0
          %933 = vmatprep.subr.bf16.mxu0 0
          %934 = vmatpush1.bf16.msra.mxu0 0
          %935 = vmatprep.mubr.bf16.mxu0 0
          %936 = vmatmul.mubr.bf16.gmra.mrb[0].mxu0 %v831
          %v937 = vpop.f32.mrb[0].mxu0
          %v938 = vadd.f32 0.0, %v937
          %v939 = vpop.f32.mrb[0].mxu0
          %v940 = vpop.f32.mrb[0].mxu0
          %v941 = vadd.f32 0.0, %v940
          %v942 = vpop.f32.mrb[0].mxu0
          %943 = vmatprep.mubr.bf16.mxu0 0
          %944 = vmatmul.mubr.bf16.gmra.mrb[0].mxu0 %v832
          %v945 = vpop.f32.mrb[0].mxu0
          %v946 = vadd.f32 0.0, %v945
          %v947 = vpop.f32.mrb[0].mxu0
          %v948 = vpop.f32.mrb[0].mxu0
          %v949 = vadd.f32 0.0, %v948
          %v950 = vpop.f32.mrb[0].mxu0
          %951 = vmatprep.mubr.bf16.mxu0 0
          %952 = vmatmul.mubr.bf16.gmra.mrb[0].mxu0 %v833
          %v953 = vpop.f32.mrb[0].mxu0
          %v954 = vadd.f32 0.0, %v953
          %v955 = vpop.f32.mrb[0].mxu0
          %v956 = vpop.f32.mrb[0].mxu0
          %v957 = vadd.f32 0.0, %v956
          %v958 = vpop.f32.mrb[0].mxu0
          %959 = vmatprep.mubr.bf16.mxu0 0
          %960 = vmatmul.mubr.bf16.gmra.mrb[0].mxu0 %v834
          %v961 = vpop.f32.mrb[0].mxu0
          %v962 = vadd.f32 0.0, %v961
          %v963 = vpop.f32.mrb[0].mxu0
          %v964 = vpop.f32.mrb[0].mxu0
          %v965 = vadd.f32 0.0, %v964
          %v966 = vpop.f32.mrb[0].mxu0
          %967 = vmatprep.mubr.bf16.mxu0 0
          %968 = vmatmul.mubr.bf16.gmra.mrb[0].mxu0 %v835
          %v969 = vpop.f32.mrb[0].mxu0
          %v970 = vadd.f32 0.0, %v969
          %v971 = vpop.f32.mrb[0].mxu0
          %v972 = vpop.f32.mrb[0].mxu0
          %v973 = vadd.f32 0.0, %v972
          %v974 = vpop.f32.mrb[0].mxu0
          %975 = vmatprep.mubr.bf16.mxu0 0
          %976 = vmatmul.mubr.bf16.gmra.mrb[0].mxu0 %v836
          %v977 = vpop.f32.mrb[0].mxu0
          %v978 = vadd.f32 0.0, %v977
          %v979 = vpop.f32.mrb[0].mxu0
          %v980 = vpop.f32.mrb[0].mxu0
          %v981 = vadd.f32 0.0, %v980
          %v982 = vpop.f32.mrb[0].mxu0
          %983 = vmatprep.mubr.bf16.mxu0 0
          %984 = vmatmul.mubr.bf16.gmra.mrb[0].mxu0 %v837
          %v985 = vpop.f32.mrb[0].mxu0
          %v986 = vadd.f32 0.0, %v985
          %v987 = vpop.f32.mrb[0].mxu0
          %v988 = vpop.f32.mrb[0].mxu0
          %v989 = vadd.f32 0.0, %v988
          %v990 = vpop.f32.mrb[0].mxu0
          %991 = vmatprep.mubr.bf16.mxu0 0
          %992 = vmatmul.mubr.bf16.gmra.mrb[0].mxu0 %v838
          %v993 = vpop.f32.mrb[0].mxu0
          %v994 = vadd.f32 0.0, %v993
          %v995 = vpop.f32.mrb[0].mxu0
          %v996 = vpop.f32.mrb[0].mxu0
          %v997 = vadd.f32 0.0, %v996
          %v998 = vpop.f32.mrb[0].mxu0
          %999 = vdwg.mxu0
          %v1016 = vunpack.c.l.b16 %v783
          %v1017 = vunpack.c.l.b16 %v784
          %v1018 = vunpack.c.l.b16 %v785
          %v1019 = vunpack.c.l.b16 %v786
          %v1020 = vunpack.c.l.b16 %v787
          %v1021 = vunpack.c.l.b16 %v788
          %v1022 = vunpack.c.l.b16 %v789
          %v1023 = vunpack.c.l.b16 %v790
          %v1024 = vunpack.c.l.b16 %v791
          %v1025 = vunpack.c.l.b16 %v792
          %v1026 = vunpack.c.l.b16 %v793
          %v1027 = vunpack.c.l.b16 %v794
          %v1028 = vunpack.c.l.b16 %v795
          %v1029 = vunpack.c.l.b16 %v796
          %v1030 = vunpack.c.l.b16 %v797
          %v1031 = vunpack.c.l.b16 %v798
          %v1032 = vpack.c.b16 %v1017, %v1016
          %v1033 = vpack.c.b16 %v1019, %v1018
          %v1034 = vpack.c.b16 %v1021, %v1020
          %v1035 = vpack.c.b16 %v1023, %v1022
          %v1036 = vpack.c.b16 %v1025, %v1024
          %v1037 = vpack.c.b16 %v1027, %v1026
          %v1038 = vpack.c.b16 %v1029, %v1028
          %v1039 = vpack.c.b16 %v1031, %v1030
          %v1064 = vunpack.c.l.b16 %v799
          %v1065 = vunpack.c.l.b16 %v800
          %v1066 = vunpack.c.l.b16 %v801
          %v1067 = vunpack.c.l.b16 %v802
          %v1068 = vunpack.c.l.b16 %v803
          %v1069 = vunpack.c.l.b16 %v804
          %v1070 = vunpack.c.l.b16 %v805
          %v1071 = vunpack.c.l.b16 %v806
          %v1072 = vunpack.c.l.b16 %v807
          %v1073 = vunpack.c.l.b16 %v808
          %v1074 = vunpack.c.l.b16 %v809
          %v1075 = vunpack.c.l.b16 %v810
          %v1076 = vunpack.c.l.b16 %v811
          %v1077 = vunpack.c.l.b16 %v812
          %v1078 = vunpack.c.l.b16 %v813
          %v1079 = vunpack.c.l.b16 %v814
          %v1080 = vpack.c.b16 %v1065, %v1064
          %v1081 = vpack.c.b16 %v1067, %v1066
          %v1082 = vpack.c.b16 %v1069, %v1068
          %v1083 = vpack.c.b16 %v1071, %v1070
          %v1084 = vpack.c.b16 %v1073, %v1072
          %v1085 = vpack.c.b16 %v1075, %v1074
          %v1086 = vpack.c.b16 %v1077, %v1076
          %v1087 = vpack.c.b16 %v1079, %v1078
          %1096 = vmatprep.subr.bf16.mxu0 0
          %1097 = vmatpush1.bf16.msra.mxu0 %v1080
          %1098 = vmatprep.subr.bf16.mxu0 0
          %1099 = vmatpush1.bf16.msra.mxu0 %v1081
          %1100 = vmatprep.subr.bf16.mxu0 0
          %1101 = vmatpush1.bf16.msra.mxu0 %v1082
          %1102 = vmatprep.subr.bf16.mxu0 0
          %1103 = vmatpush1.bf16.msra.mxu0 %v1083
          %1104 = vmatprep.subr.bf16.mxu0 0
          %1105 = vmatpush1.bf16.msra.mxu0 %v1084
          %1106 = vmatprep.subr.bf16.mxu0 0
          %1107 = vmatpush1.bf16.msra.mxu0 %v1085
          %1108 = vmatprep.subr.bf16.mxu0 0
          %1109 = vmatpush1.bf16.msra.mxu0 %v1086
          %1110 = vmatprep.subr.bf16.mxu0 0
          %1111 = vmatpush1.bf16.msra.mxu0 %v1087
          %1112 = vmatprep.subr.bf16.mxu0 0
          %1113 = vmatpush1.bf16.msra.mxu0 0
          %1114 = vmatprep.subr.bf16.mxu0 0
          %1115 = vmatpush1.bf16.msra.mxu0 0
          %1116 = vmatprep.subr.bf16.mxu0 0
          %1117 = vmatpush1.bf16.msra.mxu0 0
          %1118 = vmatprep.subr.bf16.mxu0 0
          %1119 = vmatpush1.bf16.msra.mxu0 0
          %1120 = vmatprep.subr.bf16.mxu0 0
          %1121 = vmatpush1.bf16.msra.mxu0 0
          %1122 = vmatprep.subr.bf16.mxu0 0
          %1123 = vmatpush1.bf16.msra.mxu0 0
          %1124 = vmatprep.subr.bf16.mxu0 0
          %1125 = vmatpush1.bf16.msra.mxu0 0
          %1126 = vmatprep.subr.bf16.mxu0 0
          %1127 = vmatpush1.bf16.msra.mxu0 0
          %1128 = vmatprep.mubr.bf16.mxu0 0
          %1129 = vmatmul.mubr.bf16.gmra.mrb[0].mxu0 %v1032
          %v1130 = vpop.f32.mrb[0].mxu0
          %v1131 = vadd.f32 %v938, %v1130
          %v1132 = vpop.f32.mrb[0].mxu0
          %v1133 = vpop.f32.mrb[0].mxu0
          %v1134 = vadd.f32 %v941, %v1133
          %v1135 = vpop.f32.mrb[0].mxu0
          %1136 = vmatprep.mubr.bf16.mxu0 0
          %1137 = vmatmul.mubr.bf16.gmra.mrb[0].mxu0 %v1033
          %v1138 = vpop.f32.mrb[0].mxu0
          %v1139 = vadd.f32 %v946, %v1138
          %v1140 = vpop.f32.mrb[0].mxu0
          %v1141 = vpop.f32.mrb[0].mxu0
          %v1142 = vadd.f32 %v949, %v1141
          %v1143 = vpop.f32.mrb[0].mxu0
          %1144 = vmatprep.mubr.bf16.mxu0 0
          %1145 = vmatmul.mubr.bf16.gmra.mrb[0].mxu0 %v1034
          %v1146 = vpop.f32.mrb[0].mxu0
          %v1147 = vadd.f32 %v954, %v1146
          %v1148 = vpop.f32.mrb[0].mxu0
          %v1149 = vpop.f32.mrb[0].mxu0
          %v1150 = vadd.f32 %v957, %v1149
          %v1151 = vpop.f32.mrb[0].mxu0
          %1152 = vmatprep.mubr.bf16.mxu0 0
          %1153 = vmatmul.mubr.bf16.gmra.mrb[0].mxu0 %v1035
          %v1154 = vpop.f32.mrb[0].mxu0
          %v1155 = vadd.f32 %v962, %v1154
          %v1156 = vpop.f32.mrb[0].mxu0
          %v1157 = vpop.f32.mrb[0].mxu0
          %v1158 = vadd.f32 %v965, %v1157
          %v1159 = vpop.f32.mrb[0].mxu0
          %1160 = vmatprep.mubr.bf16.mxu0 0
          %1161 = vmatmul.mubr.bf16.gmra.mrb[0].mxu0 %v1036
          %v1162 = vpop.f32.mrb[0].mxu0
          %v1163 = vadd.f32 %v970, %v1162
          %v1164 = vpop.f32.mrb[0].mxu0
          %v1165 = vpop.f32.mrb[0].mxu0
          %v1166 = vadd.f32 %v973, %v1165
          %v1167 = vpop.f32.mrb[0].mxu0
          %1168 = vmatprep.mubr.bf16.mxu0 0
          %1169 = vmatmul.mubr.bf16.gmra.mrb[0].mxu0 %v1037
          %v1170 = vpop.f32.mrb[0].mxu0
          %v1171 = vadd.f32 %v978, %v1170
          %v1172 = vpop.f32.mrb[0].mxu0
          %v1173 = vpop.f32.mrb[0].mxu0
          %v1174 = vadd.f32 %v981, %v1173
          %v1175 = vpop.f32.mrb[0].mxu0
          %1176 = vmatprep.mubr.bf16.mxu0 0
          %1177 = vmatmul.mubr.bf16.gmra.mrb[0].mxu0 %v1038
          %v1178 = vpop.f32.mrb[0].mxu0
          %v1179 = vadd.f32 %v986, %v1178
          %v1180 = vpop.f32.mrb[0].mxu0
          %v1181 = vpop.f32.mrb[0].mxu0
          %v1182 = vadd.f32 %v989, %v1181
          %v1183 = vpop.f32.mrb[0].mxu0
          %1184 = vmatprep.mubr.bf16.mxu0 0
          %1185 = vmatmul.mubr.bf16.gmra.mrb[0].mxu0 %v1039
          %v1186 = vpop.f32.mrb[0].mxu0
          %v1187 = vadd.f32 %v994, %v1186
          %v1188 = vpop.f32.mrb[0].mxu0
          %v1189 = vpop.f32.mrb[0].mxu0
          %v1190 = vadd.f32 %v997, %v1189
          %v1191 = vpop.f32.mrb[0].mxu0
          %1192 = vdwg.mxu0
          %v1193 = vmax.f32 %v1131, 0.0
          %v1194 = vmax.f32 %v1134, 0.0
          %v1195 = vmax.f32 %v1139, 0.0
          %v1196 = vmax.f32 %v1142, 0.0
          %v1197 = vmax.f32 %v1147, 0.0
          %v1198 = vmax.f32 %v1150, 0.0
          %v1199 = vmax.f32 %v1155, 0.0
          %v1200 = vmax.f32 %v1158, 0.0
          %v1201 = vmax.f32 %v1163, 0.0
          %v1202 = vmax.f32 %v1166, 0.0
          %v1203 = vmax.f32 %v1171, 0.0
          %v1204 = vmax.f32 %v1174, 0.0
          %v1205 = vmax.f32 %v1179, 0.0
          %v1206 = vmax.f32 %v1182, 0.0
          %v1207 = vmax.f32 %v1187, 0.0
          %v1208 = vmax.f32 %v1190, 0.0
          %v1209 = vpack.c.bf16 %v1194, %v1193
          %v1210 = vpack.c.bf16 %v1196, %v1195
          %v1211 = vpack.c.bf16 %v1198, %v1197
          %v1212 = vpack.c.bf16 %v1200, %v1199
          %v1213 = vpack.c.bf16 %v1202, %v1201
          %v1214 = vpack.c.bf16 %v1204, %v1203
          %v1215 = vpack.c.bf16 %v1206, %v1205
          %v1216 = vpack.c.bf16 %v1208, %v1207
          %v1217 = vld [vmem:[#allocation12] sm:$0xf]
          %v1218 = vld [vmem:[#allocation12 + $0x4] sm:$0xf]
          %v1219 = vld [vmem:[#allocation12 + $0x8] sm:$0xf]
          %v1220 = vld [vmem:[#allocation12 + $0xc] sm:$0xf]
          %v1221 = vld [vmem:[#allocation12 + $0x10] sm:$0xf]
          %v1222 = vld [vmem:[#allocation12 + $0x14] sm:$0xf]
          %v1223 = vld [vmem:[#allocation12 + $0x18] sm:$0xf]
          %v1224 = vld [vmem:[#allocation12 + $0x1c] sm:$0xf]
          %v1225 = vld [vmem:[#allocation12 + $0x20] sm:$0xf]
          %v1226 = vld [vmem:[#allocation12 + $0x24] sm:$0xf]
          %v1227 = vld [vmem:[#allocation12 + $0x28] sm:$0xf]
          %v1228 = vld [vmem:[#allocation12 + $0x2c] sm:$0xf]
          %v1229 = vld [vmem:[#allocation12 + $0x30] sm:$0xf]
          %v1230 = vld [vmem:[#allocation12 + $0x34] sm:$0xf]
          %v1231 = vld [vmem:[#allocation12 + $0x38] sm:$0xf]
          %v1232 = vld [vmem:[#allocation12 + $0x3c] sm:$0xf]
          %v1249 = vunpack.c.l.b16 %v1217
          %v1250 = vunpack.c.l.b16 %v1218
          %v1251 = vunpack.c.l.b16 %v1219
          %v1252 = vunpack.c.l.b16 %v1220
          %v1253 = vunpack.c.l.b16 %v1221
          %v1254 = vunpack.c.l.b16 %v1222
          %v1255 = vunpack.c.l.b16 %v1223
          %v1256 = vunpack.c.l.b16 %v1224
          %v1257 = vunpack.c.l.b16 %v1225
          %v1258 = vunpack.c.l.b16 %v1226
          %v1259 = vunpack.c.l.b16 %v1227
          %v1260 = vunpack.c.l.b16 %v1228
          %v1261 = vunpack.c.l.b16 %v1229
          %v1262 = vunpack.c.l.b16 %v1230
          %v1263 = vunpack.c.l.b16 %v1231
          %v1264 = vunpack.c.l.b16 %v1232
          %v1265 = vpack.c.b16 %v1250, %v1249
          %v1266 = vpack.c.b16 %v1252, %v1251
          %v1267 = vpack.c.b16 %v1254, %v1253
          %v1268 = vpack.c.b16 %v1256, %v1255
          %v1269 = vpack.c.b16 %v1258, %v1257
          %v1270 = vpack.c.b16 %v1260, %v1259
          %v1271 = vpack.c.b16 %v1262, %v1261
          %v1272 = vpack.c.b16 %v1264, %v1263
          %1281 = vmatprep.subr.bf16.mxu0 0
          %1282 = vmatpush1.bf16.msra.mxu0 %v1265
          %1283 = vmatprep.subr.bf16.mxu0 0
          %1284 = vmatpush1.bf16.msra.mxu0 %v1266
          %1285 = vmatprep.subr.bf16.mxu0 0
          %1286 = vmatpush1.bf16.msra.mxu0 %v1267
          %1287 = vmatprep.subr.bf16.mxu0 0
          %1288 = vmatpush1.bf16.msra.mxu0 %v1268
          %1289 = vmatprep.subr.bf16.mxu0 0
          %1290 = vmatpush1.bf16.msra.mxu0 %v1269
          %1291 = vmatprep.subr.bf16.mxu0 0
          %1292 = vmatpush1.bf16.msra.mxu0 %v1270
          %1293 = vmatprep.subr.bf16.mxu0 0
          %1294 = vmatpush1.bf16.msra.mxu0 %v1271
          %1295 = vmatprep.subr.bf16.mxu0 0
          %1296 = vmatpush1.bf16.msra.mxu0 %v1272
          %1297 = vmatprep.subr.bf16.mxu0 0
          %1298 = vmatpush1.bf16.msra.mxu0 0
          %1299 = vmatprep.subr.bf16.mxu0 0
          %1300 = vmatpush1.bf16.msra.mxu0 0
          %1301 = vmatprep.subr.bf16.mxu0 0
          %1302 = vmatpush1.bf16.msra.mxu0 0
          %1303 = vmatprep.subr.bf16.mxu0 0
          %1304 = vmatpush1.bf16.msra.mxu0 0
          %1305 = vmatprep.subr.bf16.mxu0 0
          %1306 = vmatpush1.bf16.msra.mxu0 0
          %1307 = vmatprep.subr.bf16.mxu0 0
          %1308 = vmatpush1.bf16.msra.mxu0 0
          %1309 = vmatprep.subr.bf16.mxu0 0
          %1310 = vmatpush1.bf16.msra.mxu0 0
          %1311 = vmatprep.subr.bf16.mxu0 0
          %1312 = vmatpush1.bf16.msra.mxu0 0
          %1313 = vmatprep.mubr.bf16.mxu0 0
          %1314 = vmatmul.mubr.bf16.gmra.mrb[0].mxu0 %v1209
          %v1315 = vpop.f32.mrb[0].mxu0
          %v1316 = vadd.f32 0.0, %v1315
          %v1317 = vpop.f32.mrb[0].mxu0
          %v1318 = vpop.f32.mrb[0].mxu0
          %v1319 = vadd.f32 0.0, %v1318
          %v1320 = vpop.f32.mrb[0].mxu0
          %1321 = vmatprep.mubr.bf16.mxu0 0
          %1322 = vmatmul.mubr.bf16.gmra.mrb[0].mxu0 %v1210
          %v1323 = vpop.f32.mrb[0].mxu0
          %v1324 = vadd.f32 0.0, %v1323
          %v1325 = vpop.f32.mrb[0].mxu0
          %v1326 = vpop.f32.mrb[0].mxu0
          %v1327 = vadd.f32 0.0, %v1326
          %v1328 = vpop.f32.mrb[0].mxu0
          %1329 = vmatprep.mubr.bf16.mxu0 0
          %1330 = vmatmul.mubr.bf16.gmra.mrb[0].mxu0 %v1211
          %v1331 = vpop.f32.mrb[0].mxu0
          %v1332 = vadd.f32 0.0, %v1331
          %v1333 = vpop.f32.mrb[0].mxu0
          %v1334 = vpop.f32.mrb[0].mxu0
          %v1335 = vadd.f32 0.0, %v1334
          %v1336 = vpop.f32.mrb[0].mxu0
          %1337 = vmatprep.mubr.bf16.mxu0 0
          %1338 = vmatmul.mubr.bf16.gmra.mrb[0].mxu0 %v1212
          %v1339 = vpop.f32.mrb[0].mxu0
          %v1340 = vadd.f32 0.0, %v1339
          %v1341 = vpop.f32.mrb[0].mxu0
          %v1342 = vpop.f32.mrb[0].mxu0
          %v1343 = vadd.f32 0.0, %v1342
          %v1344 = vpop.f32.mrb[0].mxu0
          %1345 = vmatprep.mubr.bf16.mxu0 0
          %1346 = vmatmul.mubr.bf16.gmra.mrb[0].mxu0 %v1213
          %v1347 = vpop.f32.mrb[0].mxu0
          %v1348 = vadd.f32 0.0, %v1347
          %v1349 = vpop.f32.mrb[0].mxu0
          %v1350 = vpop.f32.mrb[0].mxu0
          %v1351 = vadd.f32 0.0, %v1350
          %v1352 = vpop.f32.mrb[0].mxu0
          %1353 = vmatprep.mubr.bf16.mxu0 0
          %1354 = vmatmul.mubr.bf16.gmra.mrb[0].mxu0 %v1214
          %v1355 = vpop.f32.mrb[0].mxu0
          %v1356 = vadd.f32 0.0, %v1355
          %v1357 = vpop.f32.mrb[0].mxu0
          %v1358 = vpop.f32.mrb[0].mxu0
          %v1359 = vadd.f32 0.0, %v1358
          %v1360 = vpop.f32.mrb[0].mxu0
          %1361 = vmatprep.mubr.bf16.mxu0 0
          %1362 = vmatmul.mubr.bf16.gmra.mrb[0].mxu0 %v1215
          %v1363 = vpop.f32.mrb[0].mxu0
          %v1364 = vadd.f32 0.0, %v1363
          %v1365 = vpop.f32.mrb[0].mxu0
          %v1366 = vpop.f32.mrb[0].mxu0
          %v1367 = vadd.f32 0.0, %v1366
          %v1368 = vpop.f32.mrb[0].mxu0
          %1369 = vmatprep.mubr.bf16.mxu0 0
          %1370 = vmatmul.mubr.bf16.gmra.mrb[0].mxu0 %v1216
          %v1371 = vpop.f32.mrb[0].mxu0
          %v1372 = vadd.f32 0.0, %v1371
          %v1373 = vpop.f32.mrb[0].mxu0
          %v1374 = vpop.f32.mrb[0].mxu0
          %v1375 = vadd.f32 0.0, %v1374
          %v1376 = vpop.f32.mrb[0].mxu0
          %1377 = vdwg.mxu0
          %1378 = vst [vmem:[#allocation14] sm:$0xff] %v1316
          %1379 = vst [vmem:[#allocation14 + $0x8] sm:$0xff] %v1319
          %1380 = vst [vmem:[#allocation14 + $0x10] sm:$0xff] %v1324
          %1381 = vst [vmem:[#allocation14 + $0x18] sm:$0xff] %v1327
          %1382 = vst [vmem:[#allocation14 + $0x20] sm:$0xff] %v1332
          %1383 = vst [vmem:[#allocation14 + $0x28] sm:$0xff] %v1335
          %1384 = vst [vmem:[#allocation14 + $0x30] sm:$0xff] %v1340
          %1385 = vst [vmem:[#allocation14 + $0x38] sm:$0xff] %v1343
          %1386 = vst [vmem:[#allocation14 + $0x40] sm:$0xff] %v1348
          %1387 = vst [vmem:[#allocation14 + $0x48] sm:$0xff] %v1351
          %1388 = vst [vmem:[#allocation14 + $0x50] sm:$0xff] %v1356
          %1389 = vst [vmem:[#allocation14 + $0x58] sm:$0xff] %v1359
          %1390 = vst [vmem:[#allocation14 + $0x60] sm:$0xff] %v1364
          %1391 = vst [vmem:[#allocation14 + $0x68] sm:$0xff] %v1367
          %1392 = vst [vmem:[#allocation14 + $0x70] sm:$0xff] %v1372
          %1393 = vst [vmem:[#allocation14 + $0x78] sm:$0xff] %v1375
        $region76: #{tpu_custom_call.1} parent=43 // pred_fallthru
          _
        // Predicated region
        $region77: #{tpu_custom_call.1} parent=43 // pred_check
          %p1394 = pneg %p197
        $region78: #{tpu_custom_call.1} parent=43 // pred_check_branch
          %1396 = sbr.rel (%p1394) target = $region80
        $region79: #{tpu_custom_call.1} parent=43 // pred_region
          %s1397 = smul.u32 16, %s28
          %s1399 = ssub.s32 2048, 2048
          %1400 = vsyncadd [#allocation5], %s1399
          %s1401 = smul.addr %s1397, 128
          %s1402 = scalar_lea.hbm %s6, %s1401
          %s1403 = sshll.u32 [#allocation14], 4
          %s1404 = int_to_ptr.vmem [resolvable:$true] %s1403
          %1409 = dma.vmem_to_hbm [thread:$0]  %s1404, 2048, %s1402, [#allocation5], 128, 128, 8
        $region80: #{tpu_custom_call.1} parent=43 // pred_fallthru
          _
        // Predicated region
        $region81: #{tpu_custom_call.1} parent=43 // pred_check
          %p1410 = pneg %p197
        $region82: #{tpu_custom_call.1} parent=43 // pred_check_branch
          %1412 = sbr.rel (%p1410) target = $region84
        $region83: #{tpu_custom_call.1} parent=43 // pred_region
          %1413 = dma.done [#allocation5], 2048
        $region84: #{tpu_custom_call.1} parent=43 // pred_fallthru
          _
      $region44: #{tpu_custom_call.1} parent=5 // pred_fallthru
        _
      %p1414 = scmp.le.s32.totalorder 2, %s19
      // Predicated region
      $region85: #{tpu_custom_call.1} parent=5 // pred_check
        %p1415 = pneg %p1414
      $region86: #{tpu_custom_call.1} parent=5 // pred_check_branch
        %1417 = sbr.rel (%p1415) target = $region88
      $region87: #{tpu_custom_call.1} parent=5 // pred_region
        %s1418 = ssub.s32 %s19, 2
      $region88: #{tpu_custom_call.1} parent=5 // pred_fallthru
        _
    $region6: #{tpu_custom_call.1} parent=1 // loop_footer
      %s23 = sadd.s32 1, %s19
    $region7: #{tpu_custom_call.1} parent=1 // loop_footer_branch
      %18 = sbr.rel target = $region3
    $region8: #{tpu_custom_call.1} parent=1 // loop_exit
      _
    %1419 = vsyncpa [#allocation4], 1
    %s1420 = scalar_lea.sflag [#allocation4], 1
    %1421 = vsyncpa %s1420, 1
    %1422 = vsyncpa [#allocation7], 1
    %s1423 = scalar_lea.sflag [#allocation7], 1
    %1424 = vsyncpa %s1423, 1
    %1425 = vsyncpa [#allocation10], 1
    %1426 = vsyncpa [#allocation13], 1
    %1427 = vsyncpa [#allocation5], 1
    %s1428 = scalar_lea.sflag [#allocation5], 1
    %1429 = vsyncpa %s1428, 1

</llo_original>
